<compile_context>
chip_gen: v6e
topology: v6e:2x2x1
jax: 0.10.0
libtpu: 0.0.40
codegen_flags: <defaults>
</compile_context>

<pallas_src>
import jax
import jax.numpy as jnp
import numpy as np
from jax.experimental import pallas as pl
from jax.experimental.pallas import tpu as pltpu

LANE = 128   # vreg lane width
SUB = 8      # vreg sublane count / inner unroll block


def _rup(n, m):
    return ((n + m - 1) // m) * m


# ----------------------------------------------------------------------------
# One-time weight preparation (transpose, compact gate slab, bias sum,
# zero-padding, bf16 cast of matmul operands).  PyTorch gate order [i,f,g,o]
# is kept — sigmoid/tanh are evaluated on the whole slab and gates are
# extracted with lane slices, so no reorder is needed.
# ----------------------------------------------------------------------------
def _prep_input_matrix(w, four_h, din_real, din_pad, g4p):
    """w: (4h, din) PyTorch layout -> bf16 (din_pad, g4p), zero padded rows/cols."""
    wt = jnp.asarray(w, jnp.float32).T                     # (din, 4h)
    out = jnp.zeros((din_pad, g4p), jnp.float32)
    out = out.at[:din_real, :four_h].set(wt)
    return out.astype(jnp.bfloat16)


def _prep_recurrent_matrix(w, h, g4p):
    """w: (4h, h) -> bf16 (h, g4p) compact (no padded contraction rows)."""
    wt = jnp.asarray(w, jnp.float32).T                     # (h, 4h)
    out = jnp.zeros((h, g4p), jnp.float32)
    out = out.at[:, :4 * h].set(wt)
    return out.astype(jnp.bfloat16)


def _prep_bias(b_ih, b_hh, four_h, g4p):
    b = jnp.asarray(b_ih, jnp.float32) + jnp.asarray(b_hh, jnp.float32)  # (4h,)
    return jnp.zeros((1, g4p), jnp.float32).at[0, :four_h].set(b)


def _prep_fc(w, b, h, hin_pad, o, op):
    wt = jnp.asarray(w, jnp.float32).T                     # (h, o)
    w_p = (jnp.zeros((hin_pad, op), jnp.float32)
           .at[:h, :o].set(wt).astype(jnp.bfloat16))
    b_p = jnp.zeros((1, op), jnp.float32).at[0, :o].set(jnp.asarray(b, jnp.float32))
    return w_p, b_p


def prepare_params(params, input_dim, hidden_dims, output_dim):
    Dp = _rup(input_dim, LANE)
    ACTW = _rup(max(hidden_dims), LANE)
    Op = _rup(output_dim, LANE)
    flat = []
    din_real, din_pad = input_dim, Dp
    for l, layer in enumerate(params["lstm_layers"]):
        h = hidden_dims[l]
        g4p = _rup(4 * h, LANE)
        flat.append(_prep_input_matrix(layer["w_ih"], 4 * h, din_real, din_pad, g4p))
        flat.append(_prep_recurrent_matrix(layer["w_hh"], h, g4p))
        flat.append(_prep_bias(layer["b_ih"], layer["b_hh"], 4 * h, g4p))
        din_real, din_pad = h, ACTW
    fcw, fcb = _prep_fc(params["fc_w"], params["fc_b"], hidden_dims[-1], ACTW,
                        output_dim, Op)
    flat += [fcw, fcb]
    return tuple(flat)


# ----------------------------------------------------------------------------
# Fused forward: single pallas_call for the whole model.
# ----------------------------------------------------------------------------
def make_fused_forward(input_dim, hidden_dims, output_dim, seq_len):
    L = len(hidden_dims)
    T = seq_len
    Tp = _rup(T, SUB)
    Dp = _rup(input_dim, LANE)
    ACTW = _rup(max(hidden_dims), LANE)
    Op = _rup(output_dim, LANE)
    G4max = max(_rup(4 * h, LANE) for h in hidden_dims)
    nblk = Tp // SUB
    unroll = nblk if nblk <= 4 else 4   # fixed small unroll for long T too

    def kernel(*refs):
        x_ref = refs[0]
        layer_refs = refs[1:1 + 3 * L]
        fcw_ref = refs[1 + 3 * L]
        fcb_ref = refs[2 + 3 * L]
        out_ref = refs[3 + 3 * L]
        act_ref = refs[4 + 3 * L]      # (Tp, ACTW)  f32 inter-layer activations
        gx_ref = refs[5 + 3 * L]       # (Tp, G4max) f32 precomputed input gates

        # Zero the activation buffer once so padded columns never carry
        # uninitialized VMEM (0 * NaN from zero weight rows would contaminate).
        act_ref[...] = jnp.zeros_like(act_ref)

        for l in range(L):
            wih_ref = layer_refs[3 * l]
            whh_ref = layer_refs[3 * l + 1]
            b_ref = layer_refs[3 * l + 2]
            h_dim = hidden_dims[l]
            g4 = _rup(4 * h_dim, LANE)

            # Throughput matmul: input-gate contribution for ALL timesteps.
            # (Reading act_ref here and overwriting it in the recurrence below
            # is safe: gx is fully materialized first; ref effects are ordered.)
            src = x_ref[...] if l == 0 else act_ref[...].astype(jnp.bfloat16)
            gx_ref[:, :g4] = (
                jnp.dot(src, wih_ref[...], preferred_element_type=jnp.float32)
                + b_ref[...]
            )

            # Hoist the (h, 4h) bf16 recurrent weight out of the serial loop.
            whh = whh_ref[...]

            def block_step(blk, carry):
                h, c = carry
                base = pl.multiple_of(blk * SUB, SUB)
                # One dense (SUB, 4h) load per block; rows sliced in-register.
                gx_tile = gx_ref[pl.ds(base, SUB), :g4]
                rows = []
                for r in range(SUB):           # static unroll: LLO visibility
                    gates = gx_tile[r:r + 1, :] + jnp.dot(
                        h, whh, preferred_element_type=jnp.float32)
                    sig = jax.nn.sigmoid(gates)        # whole 4h slab, 1 vreg
                    th = jnp.tanh(gates)               # whole 4h slab, 1 vreg
                    i_g = sig[:, 0:h_dim]
                    f_g = sig[:, h_dim:2 * h_dim]
                    g_g = th[:, 2 * h_dim:3 * h_dim]
                    o_g = sig[:, 3 * h_dim:4 * h_dim]
                    c = f_g * c + i_g * g_g            # f32 cell state
                    h_f32 = o_g * jnp.tanh(c)
                    h = h_f32.astype(jnp.bfloat16)     # bf16 for the next MXU op
                    rows.append(h_f32)
                # Single (SUB, h) block store of the hidden sequence.
                act_ref[pl.ds(base, SUB), :h_dim] = jnp.concatenate(rows, axis=0)
                return (h, c)

            h0 = jnp.zeros((1, h_dim), jnp.bfloat16)
            c0 = jnp.zeros((1, h_dim), jnp.float32)
            jax.lax.fori_loop(0, nblk, block_step, (h0, c0), unroll=unroll)

        # Final Linear over all timesteps (== fc(out[:, -1, :]) for batch 1).
        out_ref[...] = (
            jnp.dot(act_ref[...].astype(jnp.bfloat16), fcw_ref[...],
                    preferred_element_type=jnp.float32)
            + fcb_ref[...]
        )

    num_inputs = 1 + 3 * L + 2
    vmem = pl.BlockSpec(memory_space=pltpu.MemorySpace.VMEM)

    pallas_fn = pl.pallas_call(
        kernel,
        out_shape=jax.ShapeDtypeStruct((Tp, Op), jnp.float32),
        in_specs=[vmem] * num_inputs,
        out_specs=vmem,
        scratch_shapes=[
            pltpu.VMEM((Tp, ACTW), jnp.float32),     # act buffer
            pltpu.VMEM((Tp, G4max), jnp.float32),    # gx buffer (compact slab)
        ],
        compiler_params=pltpu.CompilerParams(vmem_limit_bytes=32 * 1024 * 1024),
    )

    @jax.jit
    def forward(x, flat_params):
        x_p = jnp.zeros((Tp, Dp), jnp.float32).at[:T, :input_dim].set(x)
        out_p = pallas_fn(x_p.astype(jnp.bfloat16), *flat_params)
        return out_p[:T, :output_dim]

    return forward


# ----------------------------------------------------------------------------
# Pure-JAX reference (unpadded, f32, PyTorch gate order) for correctness check.
# ----------------------------------------------------------------------------
def _reference_forward(x, params):
    out = x
    for layer in params["lstm_layers"]:
        w_ih, w_hh = layer["w_ih"], layer["w_hh"]
        b = layer["b_ih"] + layer["b_hh"]
        H = w_hh.shape[1]
        h = jnp.zeros((H,), jnp.float32)
        c = jnp.zeros((H,), jnp.float32)

        def step(carry, x_t):
            h, c = carry
            gates = x_t @ w_ih.T + h @ w_hh.T + b
            i = jax.nn.sigmoid(gates[0:H])
            f = jax.nn.sigmoid(gates[H:2 * H])
            g = jnp.tanh(gates[2 * H:3 * H])
            o = jax.nn.sigmoid(gates[3 * H:4 * H])
            c = f * c + i * g
            h = o * jnp.tanh(c)
            return (h, c), h

        _, out = jax.lax.scan(step, (h, c), out)
    return out @ params["fc_w"].T + params["fc_b"]


# ----------------------------------------------------------------------------
# Deterministic parameter construction (shapes follow nn.LSTM / nn.Linear)
# ----------------------------------------------------------------------------
def make_params(key, input_dim, hidden_dims, output_dim):
    params = {"lstm_layers": []}
    d = input_dim
    for h in hidden_dims:
        key, k1, k2, k3, k4 = jax.random.split(key, 5)
        s = 1.0 / np.sqrt(h)
        params["lstm_layers"].append({
            "w_ih": jax.random.uniform(k1, (4 * h, d), jnp.float32, -s, s),
            "w_hh": jax.random.uniform(k2, (4 * h, h), jnp.float32, -s, s),
            "b_ih": jax.random.uniform(k3, (4 * h,), jnp.float32, -s, s),
            "b_hh": jax.random.uniform(k4, (4 * h,), jnp.float32, -s, s),
        })
        d = h
    key, k1, k2 = jax.random.split(key, 3)
    s = 1.0 / np.sqrt(d)
    params["fc_w"] = jax.random.uniform(k1, (output_dim, d), jnp.float32, -s, s)
    params["fc_b"] = jax.random.uniform(k2, (output_dim,), jnp.float32, -s, s)
    return params


if __name__ == "__main__":
    seq_len = 8
    input_dim = 16
    hidden_dims = [32, 32]
    output_dim = 8

    key = jax.random.PRNGKey(0)
    key, kx = jax.random.split(key)
    x = jax.random.normal(kx, (seq_len, input_dim), jnp.float32)
    params = make_params(key, input_dim, hidden_dims, output_dim)

    flat_params = prepare_params(params, input_dim, hidden_dims, output_dim)
    forward = make_fused_forward(input_dim, hidden_dims, output_dim, seq_len)

    out = jax.block_until_ready(forward(x, flat_params))

    ref = jax.block_until_ready(_reference_forward(x, params))
    # bf16 matmul operands (f32 accumulation / f32 cell state) => loosened tol.
    np.testing.assert_allclose(np.asarray(out), np.asarray(ref),
                               rtol=2e-2, atol=2e-2)
    assert out.shape == (seq_len, output_dim)
    print("KERNEL_OK")
</pallas_src>

<mosaic_0001>
module attributes {stable_mosaic.version = 11 : i64} {
  func.func @kernel(%arg0: memref<8x128xbf16, #tpu.memory_space<vmem>>, %arg1: memref<128x128xbf16, #tpu.memory_space<vmem>>, %arg2: memref<32x128xbf16, #tpu.memory_space<vmem>>, %arg3: memref<1x128xf32, #tpu.memory_space<vmem>>, %arg4: memref<128x128xbf16, #tpu.memory_space<vmem>>, %arg5: memref<32x128xbf16, #tpu.memory_space<vmem>>, %arg6: memref<1x128xf32, #tpu.memory_space<vmem>>, %arg7: memref<128x128xbf16, #tpu.memory_space<vmem>>, %arg8: memref<1x128xf32, #tpu.memory_space<vmem>>, %arg9: memref<8x128xf32, #tpu.memory_space<vmem>>, %arg10: memref<8x128xf32, #tpu.memory_space<vmem>>, %arg11: memref<8x128xf32, #tpu.memory_space<vmem>>) attributes {dimension_semantics = [], scalar_prefetch = 0 : i64, scratch_operands = 2 : i64, tpu.core_type = #tpu.core_type<tc>} {
    %cst = arith.constant 0.000000e+00 : f32
    %0 = vector.broadcast %cst : f32 to vector<8x128xf32>
    %c0 = arith.constant 0 : index
    %c0_0 = arith.constant 0 : index
    %1 = vector.load %arg10[%c0, %c0_0] : memref<8x128xf32, #tpu.memory_space<vmem>>, vector<8x128xf32>
    tpu.vector_store %arg10[%c0, %c0_0], %0 {strides = array<i32>} : memref<8x128xf32, #tpu.memory_space<vmem>>, vector<8x128xf32>,
    %c0_1 = arith.constant 0 : index
    %c0_2 = arith.constant 0 : index
    %2 = vector.load %arg0[%c0_1, %c0_2] : memref<8x128xbf16, #tpu.memory_space<vmem>>, vector<8x128xbf16>
    %c0_3 = arith.constant 0 : index
    %c0_4 = arith.constant 0 : index
    %3 = vector.load %arg1[%c0_3, %c0_4] : memref<128x128xbf16, #tpu.memory_space<vmem>>, vector<128x128xbf16>
    %cst_5 = arith.constant dense<0.000000e+00> : vector<8x128xf32>
    %4 = tpu.matmul %2, %3, %cst_5 {dimension_numbers = #tpu.dot_dimension_numbers<[1], [0], [0], [1], [0, 0, 1, 1], [], []>} : vector<8x128xbf16>, vector<128x128xbf16>, vector<8x128xf32> -> vector<8x128xf32>
    %c0_6 = arith.constant 0 : index
    %c0_7 = arith.constant 0 : index
    %5 = vector.load %arg3[%c0_6, %c0_7] : memref<1x128xf32, #tpu.memory_space<vmem>>, vector<1x128xf32>
    %6 = vector.broadcast %5 : vector<1x128xf32> to vector<8x128xf32>
    %7 = arith.addf %4, %6 : vector<8x128xf32>
    %c0_8 = arith.constant 0 : index
    %c0_9 = arith.constant 0 : index
    %8 = vector.load %arg11[%c0_8, %c0_9] : memref<8x128xf32, #tpu.memory_space<vmem>>, vector<8x128xf32>
    tpu.vector_store %arg11[%c0_8, %c0_9], %7 {strides = array<i32>} : memref<8x128xf32, #tpu.memory_space<vmem>>, vector<8x128xf32>,
    %c0_10 = arith.constant 0 : index
    %c0_11 = arith.constant 0 : index
    %9 = vector.load %arg2[%c0_10, %c0_11] : memref<32x128xbf16, #tpu.memory_space<vmem>>, vector<32x128xbf16>
    %cst_12 = arith.constant 0.000000e+00 : bf16
    %10 = vector.broadcast %cst_12 : bf16 to vector<1x32xbf16>
    %cst_13 = arith.constant 0.000000e+00 : f32
    %11 = vector.broadcast %cst_13 : f32 to vector<1x32xf32>
    %c0_i32 = arith.constant 0 : i32
    %c8_i32 = arith.constant 8 : i32
    %12 = arith.muli %c0_i32, %c8_i32 : i32
    %13 = tpu.assume_multiple %12, 8 : i32
    %14 = arith.index_cast %13 : i32 to index
    %c0_14 = arith.constant 0 : index
    %15 = vector.load %arg11[%14, %c0_14] : memref<8x128xf32, #tpu.memory_space<vmem>>, vector<8x128xf32>
    %16 = vector.extract_strided_slice %15 {offsets = [0, 0], sizes = [1, 128], strides = [1, 1]} : vector<8x128xf32> to vector<1x128xf32>
    %cst_15 = arith.constant dense<0.000000e+00> : vector<1x128xf32>
    %17 = tpu.matmul %10, %9, %cst_15 {dimension_numbers = #tpu.dot_dimension_numbers<[1], [0], [0], [1], [0, 0, 1, 1], [], []>} : vector<1x32xbf16>, vector<32x128xbf16>, vector<1x128xf32> -> vector<1x128xf32>
    %18 = arith.addf %16, %17 : vector<1x128xf32>
    %19 = arith.negf %18 : vector<1x128xf32>
    %20 = math.exp %19 : vector<1x128xf32>
    %cst_16 = arith.constant 1.000000e+00 : f32
    %21 = vector.broadcast %cst_16 : f32 to vector<1x128xf32>
    %22 = arith.addf %21, %20 : vector<1x128xf32>
    %23 = arith.divf %21, %22 : vector<1x128xf32>
    %24 = math.tanh %18 : vector<1x128xf32>
    %25 = vector.extract_strided_slice %23 {offsets = [0, 0], sizes = [1, 32], strides = [1, 1]} : vector<1x128xf32> to vector<1x32xf32>
    %26 = vector.extract_strided_slice %23 {offsets = [0, 32], sizes = [1, 32], strides = [1, 1]} : vector<1x128xf32> to vector<1x32xf32>
    %27 = vector.extract_strided_slice %24 {offsets = [0, 64], sizes = [1, 32], strides = [1, 1]} : vector<1x128xf32> to vector<1x32xf32>
    %28 = vector.extract_strided_slice %23 {offsets = [0, 96], sizes = [1, 32], strides = [1, 1]} : vector<1x128xf32> to vector<1x32xf32>
    %29 = arith.mulf %26, %11 : vector<1x32xf32>
    %30 = arith.mulf %25, %27 : vector<1x32xf32>
    %31 = arith.addf %29, %30 : vector<1x32xf32>
    %32 = math.tanh %31 : vector<1x32xf32>
    %33 = arith.mulf %28, %32 : vector<1x32xf32>
    %34 = arith.truncf %33 : vector<1x32xf32> to vector<1x32xbf16>
    %35 = vector.extract_strided_slice %15 {offsets = [1, 0], sizes = [1, 128], strides = [1, 1]} : vector<8x128xf32> to vector<1x128xf32>
    %cst_17 = arith.constant dense<0.000000e+00> : vector<1x128xf32>
    %36 = tpu.matmul %34, %9, %cst_17 {dimension_numbers = #tpu.dot_dimension_numbers<[1], [0], [0], [1], [0, 0, 1, 1], [], []>} : vector<1x32xbf16>, vector<32x128xbf16>, vector<1x128xf32> -> vector<1x128xf32>
    %37 = arith.addf %35, %36 : vector<1x128xf32>
    %38 = arith.negf %37 : vector<1x128xf32>
    %39 = math.exp %38 : vector<1x128xf32>
    %cst_18 = arith.constant 1.000000e+00 : f32
    %40 = vector.broadcast %cst_18 : f32 to vector<1x128xf32>
    %41 = arith.addf %40, %39 : vector<1x128xf32>
    %42 = arith.divf %40, %41 : vector<1x128xf32>
    %43 = math.tanh %37 : vector<1x128xf32>
    %44 = vector.extract_strided_slice %42 {offsets = [0, 0], sizes = [1, 32], strides = [1, 1]} : vector<1x128xf32> to vector<1x32xf32>
    %45 = vector.extract_strided_slice %42 {offsets = [0, 32], sizes = [1, 32], strides = [1, 1]} : vector<1x128xf32> to vector<1x32xf32>
    %46 = vector.extract_strided_slice %43 {offsets = [0, 64], sizes = [1, 32], strides = [1, 1]} : vector<1x128xf32> to vector<1x32xf32>
    %47 = vector.extract_strided_slice %42 {offsets = [0, 96], sizes = [1, 32], strides = [1, 1]} : vector<1x128xf32> to vector<1x32xf32>
    %48 = arith.mulf %45, %31 : vector<1x32xf32>
    %49 = arith.mulf %44, %46 : vector<1x32xf32>
    %50 = arith.addf %48, %49 : vector<1x32xf32>
    %51 = math.tanh %50 : vector<1x32xf32>
    %52 = arith.mulf %47, %51 : vector<1x32xf32>
    %53 = arith.truncf %52 : vector<1x32xf32> to vector<1x32xbf16>
    %54 = vector.extract_strided_slice %15 {offsets = [2, 0], sizes = [1, 128], strides = [1, 1]} : vector<8x128xf32> to vector<1x128xf32>
    %cst_19 = arith.constant dense<0.000000e+00> : vector<1x128xf32>
    %55 = tpu.matmul %53, %9, %cst_19 {dimension_numbers = #tpu.dot_dimension_numbers<[1], [0], [0], [1], [0, 0, 1, 1], [], []>} : vector<1x32xbf16>, vector<32x128xbf16>, vector<1x128xf32> -> vector<1x128xf32>
    %56 = arith.addf %54, %55 : vector<1x128xf32>
    %57 = arith.negf %56 : vector<1x128xf32>
    %58 = math.exp %57 : vector<1x128xf32>
    %cst_20 = arith.constant 1.000000e+00 : f32
    %59 = vector.broadcast %cst_20 : f32 to vector<1x128xf32>
    %60 = arith.addf %59, %58 : vector<1x128xf32>
    %61 = arith.divf %59, %60 : vector<1x128xf32>
    %62 = math.tanh %56 : vector<1x128xf32>
    %63 = vector.extract_strided_slice %61 {offsets = [0, 0], sizes = [1, 32], strides = [1, 1]} : vector<1x128xf32> to vector<1x32xf32>
    %64 = vector.extract_strided_slice %61 {offsets = [0, 32], sizes = [1, 32], strides = [1, 1]} : vector<1x128xf32> to vector<1x32xf32>
    %65 = vector.extract_strided_slice %62 {offsets = [0, 64], sizes = [1, 32], strides = [1, 1]} : vector<1x128xf32> to vector<1x32xf32>
    %66 = vector.extract_strided_slice %61 {offsets = [0, 96], sizes = [1, 32], strides = [1, 1]} : vector<1x128xf32> to vector<1x32xf32>
    %67 = arith.mulf %64, %50 : vector<1x32xf32>
    %68 = arith.mulf %63, %65 : vector<1x32xf32>
    %69 = arith.addf %67, %68 : vector<1x32xf32>
    %70 = math.tanh %69 : vector<1x32xf32>
    %71 = arith.mulf %66, %70 : vector<1x32xf32>
    %72 = arith.truncf %71 : vector<1x32xf32> to vector<1x32xbf16>
    %73 = vector.extract_strided_slice %15 {offsets = [3, 0], sizes = [1, 128], strides = [1, 1]} : vector<8x128xf32> to vector<1x128xf32>
    %cst_21 = arith.constant dense<0.000000e+00> : vector<1x128xf32>
    %74 = tpu.matmul %72, %9, %cst_21 {dimension_numbers = #tpu.dot_dimension_numbers<[1], [0], [0], [1], [0, 0, 1, 1], [], []>} : vector<1x32xbf16>, vector<32x128xbf16>, vector<1x128xf32> -> vector<1x128xf32>
    %75 = arith.addf %73, %74 : vector<1x128xf32>
    %76 = arith.negf %75 : vector<1x128xf32>
    %77 = math.exp %76 : vector<1x128xf32>
    %cst_22 = arith.constant 1.000000e+00 : f32
    %78 = vector.broadcast %cst_22 : f32 to vector<1x128xf32>
    %79 = arith.addf %78, %77 : vector<1x128xf32>
    %80 = arith.divf %78, %79 : vector<1x128xf32>
    %81 = math.tanh %75 : vector<1x128xf32>
    %82 = vector.extract_strided_slice %80 {offsets = [0, 0], sizes = [1, 32], strides = [1, 1]} : vector<1x128xf32> to vector<1x32xf32>
    %83 = vector.extract_strided_slice %80 {offsets = [0, 32], sizes = [1, 32], strides = [1, 1]} : vector<1x128xf32> to vector<1x32xf32>
    %84 = vector.extract_strided_slice %81 {offsets = [0, 64], sizes = [1, 32], strides = [1, 1]} : vector<1x128xf32> to vector<1x32xf32>
    %85 = vector.extract_strided_slice %80 {offsets = [0, 96], sizes = [1, 32], strides = [1, 1]} : vector<1x128xf32> to vector<1x32xf32>
    %86 = arith.mulf %83, %69 : vector<1x32xf32>
    %87 = arith.mulf %82, %84 : vector<1x32xf32>
    %88 = arith.addf %86, %87 : vector<1x32xf32>
    %89 = math.tanh %88 : vector<1x32xf32>
    %90 = arith.mulf %85, %89 : vector<1x32xf32>
    %91 = arith.truncf %90 : vector<1x32xf32> to vector<1x32xbf16>
    %92 = vector.extract_strided_slice %15 {offsets = [4, 0], sizes = [1, 128], strides = [1, 1]} : vector<8x128xf32> to vector<1x128xf32>
    %cst_23 = arith.constant dense<0.000000e+00> : vector<1x128xf32>
    %93 = tpu.matmul %91, %9, %cst_23 {dimension_numbers = #tpu.dot_dimension_numbers<[1], [0], [0], [1], [0, 0, 1, 1], [], []>} : vector<1x32xbf16>, vector<32x128xbf16>, vector<1x128xf32> -> vector<1x128xf32>
    %94 = arith.addf %92, %93 : vector<1x128xf32>
    %95 = arith.negf %94 : vector<1x128xf32>
    %96 = math.exp %95 : vector<1x128xf32>
    %cst_24 = arith.constant 1.000000e+00 : f32
    %97 = vector.broadcast %cst_24 : f32 to vector<1x128xf32>
    %98 = arith.addf %97, %96 : vector<1x128xf32>
    %99 = arith.divf %97, %98 : vector<1x128xf32>
    %100 = math.tanh %94 : vector<1x128xf32>
    %101 = vector.extract_strided_slice %99 {offsets = [0, 0], sizes = [1, 32], strides = [1, 1]} : vector<1x128xf32> to vector<1x32xf32>
    %102 = vector.extract_strided_slice %99 {offsets = [0, 32], sizes = [1, 32], strides = [1, 1]} : vector<1x128xf32> to vector<1x32xf32>
    %103 = vector.extract_strided_slice %100 {offsets = [0, 64], sizes = [1, 32], strides = [1, 1]} : vector<1x128xf32> to vector<1x32xf32>
    %104 = vector.extract_strided_slice %99 {offsets = [0, 96], sizes = [1, 32], strides = [1, 1]} : vector<1x128xf32> to vector<1x32xf32>
    %105 = arith.mulf %102, %88 : vector<1x32xf32>
    %106 = arith.mulf %101, %103 : vector<1x32xf32>
    %107 = arith.addf %105, %106 : vector<1x32xf32>
    %108 = math.tanh %107 : vector<1x32xf32>
    %109 = arith.mulf %104, %108 : vector<1x32xf32>
    %110 = arith.truncf %109 : vector<1x32xf32> to vector<1x32xbf16>
    %111 = vector.extract_strided_slice %15 {offsets = [5, 0], sizes = [1, 128], strides = [1, 1]} : vector<8x128xf32> to vector<1x128xf32>
    %cst_25 = arith.constant dense<0.000000e+00> : vector<1x128xf32>
    %112 = tpu.matmul %110, %9, %cst_25 {dimension_numbers = #tpu.dot_dimension_numbers<[1], [0], [0], [1], [0, 0, 1, 1], [], []>} : vector<1x32xbf16>, vector<32x128xbf16>, vector<1x128xf32> -> vector<1x128xf32>
    %113 = arith.addf %111, %112 : vector<1x128xf32>
    %114 = arith.negf %113 : vector<1x128xf32>
    %115 = math.exp %114 : vector<1x128xf32>
    %cst_26 = arith.constant 1.000000e+00 : f32
    %116 = vector.broadcast %cst_26 : f32 to vector<1x128xf32>
    %117 = arith.addf %116, %115 : vector<1x128xf32>
    %118 = arith.divf %116, %117 : vector<1x128xf32>
    %119 = math.tanh %113 : vector<1x128xf32>
    %120 = vector.extract_strided_slice %118 {offsets = [0, 0], sizes = [1, 32], strides = [1, 1]} : vector<1x128xf32> to vector<1x32xf32>
    %121 = vector.extract_strided_slice %118 {offsets = [0, 32], sizes = [1, 32], strides = [1, 1]} : vector<1x128xf32> to vector<1x32xf32>
    %122 = vector.extract_strided_slice %119 {offsets = [0, 64], sizes = [1, 32], strides = [1, 1]} : vector<1x128xf32> to vector<1x32xf32>
    %123 = vector.extract_strided_slice %118 {offsets = [0, 96], sizes = [1, 32], strides = [1, 1]} : vector<1x128xf32> to vector<1x32xf32>
    %124 = arith.mulf %121, %107 : vector<1x32xf32>
    %125 = arith.mulf %120, %122 : vector<1x32xf32>
    %126 = arith.addf %124, %125 : vector<1x32xf32>
    %127 = math.tanh %126 : vector<1x32xf32>
    %128 = arith.mulf %123, %127 : vector<1x32xf32>
    %129 = arith.truncf %128 : vector<1x32xf32> to vector<1x32xbf16>
    %130 = vector.extract_strided_slice %15 {offsets = [6, 0], sizes = [1, 128], strides = [1, 1]} : vector<8x128xf32> to vector<1x128xf32>
    %cst_27 = arith.constant dense<0.000000e+00> : vector<1x128xf32>
    %131 = tpu.matmul %129, %9, %cst_27 {dimension_numbers = #tpu.dot_dimension_numbers<[1], [0], [0], [1], [0, 0, 1, 1], [], []>} : vector<1x32xbf16>, vector<32x128xbf16>, vector<1x128xf32> -> vector<1x128xf32>
    %132 = arith.addf %130, %131 : vector<1x128xf32>
    %133 = arith.negf %132 : vector<1x128xf32>
    %134 = math.exp %133 : vector<1x128xf32>
    %cst_28 = arith.constant 1.000000e+00 : f32
    %135 = vector.broadcast %cst_28 : f32 to vector<1x128xf32>
    %136 = arith.addf %135, %134 : vector<1x128xf32>
    %137 = arith.divf %135, %136 : vector<1x128xf32>
    %138 = math.tanh %132 : vector<1x128xf32>
    %139 = vector.extract_strided_slice %137 {offsets = [0, 0], sizes = [1, 32], strides = [1, 1]} : vector<1x128xf32> to vector<1x32xf32>
    %140 = vector.extract_strided_slice %137 {offsets = [0, 32], sizes = [1, 32], strides = [1, 1]} : vector<1x128xf32> to vector<1x32xf32>
    %141 = vector.extract_strided_slice %138 {offsets = [0, 64], sizes = [1, 32], strides = [1, 1]} : vector<1x128xf32> to vector<1x32xf32>
    %142 = vector.extract_strided_slice %137 {offsets = [0, 96], sizes = [1, 32], strides = [1, 1]} : vector<1x128xf32> to vector<1x32xf32>
    %143 = arith.mulf %140, %126 : vector<1x32xf32>
    %144 = arith.mulf %139, %141 : vector<1x32xf32>
    %145 = arith.addf %143, %144 : vector<1x32xf32>
    %146 = math.tanh %145 : vector<1x32xf32>
    %147 = arith.mulf %142, %146 : vector<1x32xf32>
    %148 = arith.truncf %147 : vector<1x32xf32> to vector<1x32xbf16>
    %149 = vector.extract_strided_slice %15 {offsets = [7, 0], sizes = [1, 128], strides = [1, 1]} : vector<8x128xf32> to vector<1x128xf32>
    %cst_29 = arith.constant dense<0.000000e+00> : vector<1x128xf32>
    %150 = tpu.matmul %148, %9, %cst_29 {dimension_numbers = #tpu.dot_dimension_numbers<[1], [0], [0], [1], [0, 0, 1, 1], [], []>} : vector<1x32xbf16>, vector<32x128xbf16>, vector<1x128xf32> -> vector<1x128xf32>
    %151 = arith.addf %149, %150 : vector<1x128xf32>
    %152 = arith.negf %151 : vector<1x128xf32>
    %153 = math.exp %152 : vector<1x128xf32>
    %cst_30 = arith.constant 1.000000e+00 : f32
    %154 = vector.broadcast %cst_30 : f32 to vector<1x128xf32>
    %155 = arith.addf %154, %153 : vector<1x128xf32>
    %156 = arith.divf %154, %155 : vector<1x128xf32>
    %157 = math.tanh %151 : vector<1x128xf32>
    %158 = vector.extract_strided_slice %156 {offsets = [0, 0], sizes = [1, 32], strides = [1, 1]} : vector<1x128xf32> to vector<1x32xf32>
    %159 = vector.extract_strided_slice %156 {offsets = [0, 32], sizes = [1, 32], strides = [1, 1]} : vector<1x128xf32> to vector<1x32xf32>
    %160 = vector.extract_strided_slice %157 {offsets = [0, 64], sizes = [1, 32], strides = [1, 1]} : vector<1x128xf32> to vector<1x32xf32>
    %161 = vector.extract_strided_slice %156 {offsets = [0, 96], sizes = [1, 32], strides = [1, 1]} : vector<1x128xf32> to vector<1x32xf32>
    %162 = arith.mulf %159, %145 : vector<1x32xf32>
    %163 = arith.mulf %158, %160 : vector<1x32xf32>
    %164 = arith.addf %162, %163 : vector<1x32xf32>
    %165 = math.tanh %164 : vector<1x32xf32>
    %166 = arith.mulf %161, %165 : vector<1x32xf32>
    %167 = arith.truncf %166 : vector<1x32xf32> to vector<1x32xbf16>
    %168 = tpu.concatenate %33, %52, %71, %90, %109, %128, %147, %166 in 0 : vector<1x32xf32>, vector<1x32xf32>, vector<1x32xf32>, vector<1x32xf32>, vector<1x32xf32>, vector<1x32xf32>, vector<1x32xf32>, vector<1x32xf32> -> vector<8x32xf32>
    %169 = arith.index_cast %13 : i32 to index
    %c0_31 = arith.constant 0 : index
    %170 = vector.load %arg10[%169, %c0_31] : memref<8x128xf32, #tpu.memory_space<vmem>>, vector<8x32xf32>
    tpu.vector_store %arg10[%169, %c0_31], %168 {strides = array<i32>} : memref<8x128xf32, #tpu.memory_space<vmem>>, vector<8x32xf32>,
    %c1_i32 = arith.constant 1 : i32
    %c0_32 = arith.constant 0 : index
    %c0_33 = arith.constant 0 : index
    %171 = vector.load %arg10[%c0_32, %c0_33] : memref<8x128xf32, #tpu.memory_space<vmem>>, vector<8x128xf32>
    %172 = arith.truncf %171 : vector<8x128xf32> to vector<8x128xbf16>
    %c0_34 = arith.constant 0 : index
    %c0_35 = arith.constant 0 : index
    %173 = vector.load %arg4[%c0_34, %c0_35] : memref<128x128xbf16, #tpu.memory_space<vmem>>, vector<128x128xbf16>
    %cst_36 = arith.constant dense<0.000000e+00> : vector<8x128xf32>
    %174 = tpu.matmul %172, %173, %cst_36 {dimension_numbers = #tpu.dot_dimension_numbers<[1], [0], [0], [1], [0, 0, 1, 1], [], []>} : vector<8x128xbf16>, vector<128x128xbf16>, vector<8x128xf32> -> vector<8x128xf32>
    %c0_37 = arith.constant 0 : index
    %c0_38 = arith.constant 0 : index
    %175 = vector.load %arg6[%c0_37, %c0_38] : memref<1x128xf32, #tpu.memory_space<vmem>>, vector<1x128xf32>
    %176 = vector.broadcast %175 : vector<1x128xf32> to vector<8x128xf32>
    %177 = arith.addf %174, %176 : vector<8x128xf32>
    %c0_39 = arith.constant 0 : index
    %c0_40 = arith.constant 0 : index
    %178 = vector.load %arg11[%c0_39, %c0_40] : memref<8x128xf32, #tpu.memory_space<vmem>>, vector<8x128xf32>
    tpu.vector_store %arg11[%c0_39, %c0_40], %177 {strides = array<i32>} : memref<8x128xf32, #tpu.memory_space<vmem>>, vector<8x128xf32>,
    %c0_41 = arith.constant 0 : index
    %c0_42 = arith.constant 0 : index
    %179 = vector.load %arg5[%c0_41, %c0_42] : memref<32x128xbf16, #tpu.memory_space<vmem>>, vector<32x128xbf16>
    %cst_43 = arith.constant 0.000000e+00 : bf16
    %180 = vector.broadcast %cst_43 : bf16 to vector<1x32xbf16>
    %cst_44 = arith.constant 0.000000e+00 : f32
    %181 = vector.broadcast %cst_44 : f32 to vector<1x32xf32>
    %c0_i32_45 = arith.constant 0 : i32
    %c8_i32_46 = arith.constant 8 : i32
    %182 = arith.muli %c0_i32_45, %c8_i32_46 : i32
    %183 = tpu.assume_multiple %182, 8 : i32
    %184 = arith.index_cast %183 : i32 to index
    %c0_47 = arith.constant 0 : index
    %185 = vector.load %arg11[%184, %c0_47] : memref<8x128xf32, #tpu.memory_space<vmem>>, vector<8x128xf32>
    %186 = vector.extract_strided_slice %185 {offsets = [0, 0], sizes = [1, 128], strides = [1, 1]} : vector<8x128xf32> to vector<1x128xf32>
    %cst_48 = arith.constant dense<0.000000e+00> : vector<1x128xf32>
    %187 = tpu.matmul %180, %179, %cst_48 {dimension_numbers = #tpu.dot_dimension_numbers<[1], [0], [0], [1], [0, 0, 1, 1], [], []>} : vector<1x32xbf16>, vector<32x128xbf16>, vector<1x128xf32> -> vector<1x128xf32>
    %188 = arith.addf %186, %187 : vector<1x128xf32>
    %189 = arith.negf %188 : vector<1x128xf32>
    %190 = math.exp %189 : vector<1x128xf32>
    %cst_49 = arith.constant 1.000000e+00 : f32
    %191 = vector.broadcast %cst_49 : f32 to vector<1x128xf32>
    %192 = arith.addf %191, %190 : vector<1x128xf32>
    %193 = arith.divf %191, %192 : vector<1x128xf32>
    %194 = math.tanh %188 : vector<1x128xf32>
    %195 = vector.extract_strided_slice %193 {offsets = [0, 0], sizes = [1, 32], strides = [1, 1]} : vector<1x128xf32> to vector<1x32xf32>
    %196 = vector.extract_strided_slice %193 {offsets = [0, 32], sizes = [1, 32], strides = [1, 1]} : vector<1x128xf32> to vector<1x32xf32>
    %197 = vector.extract_strided_slice %194 {offsets = [0, 64], sizes = [1, 32], strides = [1, 1]} : vector<1x128xf32> to vector<1x32xf32>
    %198 = vector.extract_strided_slice %193 {offsets = [0, 96], sizes = [1, 32], strides = [1, 1]} : vector<1x128xf32> to vector<1x32xf32>
    %199 = arith.mulf %196, %181 : vector<1x32xf32>
    %200 = arith.mulf %195, %197 : vector<1x32xf32>
    %201 = arith.addf %199, %200 : vector<1x32xf32>
    %202 = math.tanh %201 : vector<1x32xf32>
    %203 = arith.mulf %198, %202 : vector<1x32xf32>
    %204 = arith.truncf %203 : vector<1x32xf32> to vector<1x32xbf16>
    %205 = vector.extract_strided_slice %185 {offsets = [1, 0], sizes = [1, 128], strides = [1, 1]} : vector<8x128xf32> to vector<1x128xf32>
    %cst_50 = arith.constant dense<0.000000e+00> : vector<1x128xf32>
    %206 = tpu.matmul %204, %179, %cst_50 {dimension_numbers = #tpu.dot_dimension_numbers<[1], [0], [0], [1], [0, 0, 1, 1], [], []>} : vector<1x32xbf16>, vector<32x128xbf16>, vector<1x128xf32> -> vector<1x128xf32>
    %207 = arith.addf %205, %206 : vector<1x128xf32>
    %208 = arith.negf %207 : vector<1x128xf32>
    %209 = math.exp %208 : vector<1x128xf32>
    %cst_51 = arith.constant 1.000000e+00 : f32
    %210 = vector.broadcast %cst_51 : f32 to vector<1x128xf32>
    %211 = arith.addf %210, %209 : vector<1x128xf32>
    %212 = arith.divf %210, %211 : vector<1x128xf32>
    %213 = math.tanh %207 : vector<1x128xf32>
    %214 = vector.extract_strided_slice %212 {offsets = [0, 0], sizes = [1, 32], strides = [1, 1]} : vector<1x128xf32> to vector<1x32xf32>
    %215 = vector.extract_strided_slice %212 {offsets = [0, 32], sizes = [1, 32], strides = [1, 1]} : vector<1x128xf32> to vector<1x32xf32>
    %216 = vector.extract_strided_slice %213 {offsets = [0, 64], sizes = [1, 32], strides = [1, 1]} : vector<1x128xf32> to vector<1x32xf32>
    %217 = vector.extract_strided_slice %212 {offsets = [0, 96], sizes = [1, 32], strides = [1, 1]} : vector<1x128xf32> to vector<1x32xf32>
    %218 = arith.mulf %215, %201 : vector<1x32xf32>
    %219 = arith.mulf %214, %216 : vector<1x32xf32>
    %220 = arith.addf %218, %219 : vector<1x32xf32>
    %221 = math.tanh %220 : vector<1x32xf32>
    %222 = arith.mulf %217, %221 : vector<1x32xf32>
    %223 = arith.truncf %222 : vector<1x32xf32> to vector<1x32xbf16>
    %224 = vector.extract_strided_slice %185 {offsets = [2, 0], sizes = [1, 128], strides = [1, 1]} : vector<8x128xf32> to vector<1x128xf32>
    %cst_52 = arith.constant dense<0.000000e+00> : vector<1x128xf32>
    %225 = tpu.matmul %223, %179, %cst_52 {dimension_numbers = #tpu.dot_dimension_numbers<[1], [0], [0], [1], [0, 0, 1, 1], [], []>} : vector<1x32xbf16>, vector<32x128xbf16>, vector<1x128xf32> -> vector<1x128xf32>
    %226 = arith.addf %224, %225 : vector<1x128xf32>
    %227 = arith.negf %226 : vector<1x128xf32>
    %228 = math.exp %227 : vector<1x128xf32>
    %cst_53 = arith.constant 1.000000e+00 : f32
    %229 = vector.broadcast %cst_53 : f32 to vector<1x128xf32>
    %230 = arith.addf %229, %228 : vector<1x128xf32>
    %231 = arith.divf %229, %230 : vector<1x128xf32>
    %232 = math.tanh %226 : vector<1x128xf32>
    %233 = vector.extract_strided_slice %231 {offsets = [0, 0], sizes = [1, 32], strides = [1, 1]} : vector<1x128xf32> to vector<1x32xf32>
    %234 = vector.extract_strided_slice %231 {offsets = [0, 32], sizes = [1, 32], strides = [1, 1]} : vector<1x128xf32> to vector<1x32xf32>
    %235 = vector.extract_strided_slice %232 {offsets = [0, 64], sizes = [1, 32], strides = [1, 1]} : vector<1x128xf32> to vector<1x32xf32>
    %236 = vector.extract_strided_slice %231 {offsets = [0, 96], sizes = [1, 32], strides = [1, 1]} : vector<1x128xf32> to vector<1x32xf32>
    %237 = arith.mulf %234, %220 : vector<1x32xf32>
    %238 = arith.mulf %233, %235 : vector<1x32xf32>
    %239 = arith.addf %237, %238 : vector<1x32xf32>
    %240 = math.tanh %239 : vector<1x32xf32>
    %241 = arith.mulf %236, %240 : vector<1x32xf32>
    %242 = arith.truncf %241 : vector<1x32xf32> to vector<1x32xbf16>
    %243 = vector.extract_strided_slice %185 {offsets = [3, 0], sizes = [1, 128], strides = [1, 1]} : vector<8x128xf32> to vector<1x128xf32>
    %cst_54 = arith.constant dense<0.000000e+00> : vector<1x128xf32>
    %244 = tpu.matmul %242, %179, %cst_54 {dimension_numbers = #tpu.dot_dimension_numbers<[1], [0], [0], [1], [0, 0, 1, 1], [], []>} : vector<1x32xbf16>, vector<32x128xbf16>, vector<1x128xf32> -> vector<1x128xf32>
    %245 = arith.addf %243, %244 : vector<1x128xf32>
    %246 = arith.negf %245 : vector<1x128xf32>
    %247 = math.exp %246 : vector<1x128xf32>
    %cst_55 = arith.constant 1.000000e+00 : f32
    %248 = vector.broadcast %cst_55 : f32 to vector<1x128xf32>
    %249 = arith.addf %248, %247 : vector<1x128xf32>
    %250 = arith.divf %248, %249 : vector<1x128xf32>
    %251 = math.tanh %245 : vector<1x128xf32>
    %252 = vector.extract_strided_slice %250 {offsets = [0, 0], sizes = [1, 32], strides = [1, 1]} : vector<1x128xf32> to vector<1x32xf32>
    %253 = vector.extract_strided_slice %250 {offsets = [0, 32], sizes = [1, 32], strides = [1, 1]} : vector<1x128xf32> to vector<1x32xf32>
    %254 = vector.extract_strided_slice %251 {offsets = [0, 64], sizes = [1, 32], strides = [1, 1]} : vector<1x128xf32> to vector<1x32xf32>
    %255 = vector.extract_strided_slice %250 {offsets = [0, 96], sizes = [1, 32], strides = [1, 1]} : vector<1x128xf32> to vector<1x32xf32>
    %256 = arith.mulf %253, %239 : vector<1x32xf32>
    %257 = arith.mulf %252, %254 : vector<1x32xf32>
    %258 = arith.addf %256, %257 : vector<1x32xf32>
    %259 = math.tanh %258 : vector<1x32xf32>
    %260 = arith.mulf %255, %259 : vector<1x32xf32>
    %261 = arith.truncf %260 : vector<1x32xf32> to vector<1x32xbf16>
    %262 = vector.extract_strided_slice %185 {offsets = [4, 0], sizes = [1, 128], strides = [1, 1]} : vector<8x128xf32> to vector<1x128xf32>
    %cst_56 = arith.constant dense<0.000000e+00> : vector<1x128xf32>
    %263 = tpu.matmul %261, %179, %cst_56 {dimension_numbers = #tpu.dot_dimension_numbers<[1], [0], [0], [1], [0, 0, 1, 1], [], []>} : vector<1x32xbf16>, vector<32x128xbf16>, vector<1x128xf32> -> vector<1x128xf32>
    %264 = arith.addf %262, %263 : vector<1x128xf32>
    %265 = arith.negf %264 : vector<1x128xf32>
    %266 = math.exp %265 : vector<1x128xf32>
    %cst_57 = arith.constant 1.000000e+00 : f32
    %267 = vector.broadcast %cst_57 : f32 to vector<1x128xf32>
    %268 = arith.addf %267, %266 : vector<1x128xf32>
    %269 = arith.divf %267, %268 : vector<1x128xf32>
    %270 = math.tanh %264 : vector<1x128xf32>
    %271 = vector.extract_strided_slice %269 {offsets = [0, 0], sizes = [1, 32], strides = [1, 1]} : vector<1x128xf32> to vector<1x32xf32>
    %272 = vector.extract_strided_slice %269 {offsets = [0, 32], sizes = [1, 32], strides = [1, 1]} : vector<1x128xf32> to vector<1x32xf32>
    %273 = vector.extract_strided_slice %270 {offsets = [0, 64], sizes = [1, 32], strides = [1, 1]} : vector<1x128xf32> to vector<1x32xf32>
    %274 = vector.extract_strided_slice %269 {offsets = [0, 96], sizes = [1, 32], strides = [1, 1]} : vector<1x128xf32> to vector<1x32xf32>
    %275 = arith.mulf %272, %258 : vector<1x32xf32>
    %276 = arith.mulf %271, %273 : vector<1x32xf32>
    %277 = arith.addf %275, %276 : vector<1x32xf32>
    %278 = math.tanh %277 : vector<1x32xf32>
    %279 = arith.mulf %274, %278 : vector<1x32xf32>
    %280 = arith.truncf %279 : vector<1x32xf32> to vector<1x32xbf16>
    %281 = vector.extract_strided_slice %185 {offsets = [5, 0], sizes = [1, 128], strides = [1, 1]} : vector<8x128xf32> to vector<1x128xf32>
    %cst_58 = arith.constant dense<0.000000e+00> : vector<1x128xf32>
    %282 = tpu.matmul %280, %179, %cst_58 {dimension_numbers = #tpu.dot_dimension_numbers<[1], [0], [0], [1], [0, 0, 1, 1], [], []>} : vector<1x32xbf16>, vector<32x128xbf16>, vector<1x128xf32> -> vector<1x128xf32>
    %283 = arith.addf %281, %282 : vector<1x128xf32>
    %284 = arith.negf %283 : vector<1x128xf32>
    %285 = math.exp %284 : vector<1x128xf32>
    %cst_59 = arith.constant 1.000000e+00 : f32
    %286 = vector.broadcast %cst_59 : f32 to vector<1x128xf32>
    %287 = arith.addf %286, %285 : vector<1x128xf32>
    %288 = arith.divf %286, %287 : vector<1x128xf32>
    %289 = math.tanh %283 : vector<1x128xf32>
    %290 = vector.extract_strided_slice %288 {offsets = [0, 0], sizes = [1, 32], strides = [1, 1]} : vector<1x128xf32> to vector<1x32xf32>
    %291 = vector.extract_strided_slice %288 {offsets = [0, 32], sizes = [1, 32], strides = [1, 1]} : vector<1x128xf32> to vector<1x32xf32>
    %292 = vector.extract_strided_slice %289 {offsets = [0, 64], sizes = [1, 32], strides = [1, 1]} : vector<1x128xf32> to vector<1x32xf32>
    %293 = vector.extract_strided_slice %288 {offsets = [0, 96], sizes = [1, 32], strides = [1, 1]} : vector<1x128xf32> to vector<1x32xf32>
    %294 = arith.mulf %291, %277 : vector<1x32xf32>
    %295 = arith.mulf %290, %292 : vector<1x32xf32>
    %296 = arith.addf %294, %295 : vector<1x32xf32>
    %297 = math.tanh %296 : vector<1x32xf32>
    %298 = arith.mulf %293, %297 : vector<1x32xf32>
    %299 = arith.truncf %298 : vector<1x32xf32> to vector<1x32xbf16>
    %300 = vector.extract_strided_slice %185 {offsets = [6, 0], sizes = [1, 128], strides = [1, 1]} : vector<8x128xf32> to vector<1x128xf32>
    %cst_60 = arith.constant dense<0.000000e+00> : vector<1x128xf32>
    %301 = tpu.matmul %299, %179, %cst_60 {dimension_numbers = #tpu.dot_dimension_numbers<[1], [0], [0], [1], [0, 0, 1, 1], [], []>} : vector<1x32xbf16>, vector<32x128xbf16>, vector<1x128xf32> -> vector<1x128xf32>
    %302 = arith.addf %300, %301 : vector<1x128xf32>
    %303 = arith.negf %302 : vector<1x128xf32>
    %304 = math.exp %303 : vector<1x128xf32>
    %cst_61 = arith.constant 1.000000e+00 : f32
    %305 = vector.broadcast %cst_61 : f32 to vector<1x128xf32>
    %306 = arith.addf %305, %304 : vector<1x128xf32>
    %307 = arith.divf %305, %306 : vector<1x128xf32>
    %308 = math.tanh %302 : vector<1x128xf32>
    %309 = vector.extract_strided_slice %307 {offsets = [0, 0], sizes = [1, 32], strides = [1, 1]} : vector<1x128xf32> to vector<1x32xf32>
    %310 = vector.extract_strided_slice %307 {offsets = [0, 32], sizes = [1, 32], strides = [1, 1]} : vector<1x128xf32> to vector<1x32xf32>
    %311 = vector.extract_strided_slice %308 {offsets = [0, 64], sizes = [1, 32], strides = [1, 1]} : vector<1x128xf32> to vector<1x32xf32>
    %312 = vector.extract_strided_slice %307 {offsets = [0, 96], sizes = [1, 32], strides = [1, 1]} : vector<1x128xf32> to vector<1x32xf32>
    %313 = arith.mulf %310, %296 : vector<1x32xf32>
    %314 = arith.mulf %309, %311 : vector<1x32xf32>
    %315 = arith.addf %313, %314 : vector<1x32xf32>
    %316 = math.tanh %315 : vector<1x32xf32>
    %317 = arith.mulf %312, %316 : vector<1x32xf32>
    %318 = arith.truncf %317 : vector<1x32xf32> to vector<1x32xbf16>
    %319 = vector.extract_strided_slice %185 {offsets = [7, 0], sizes = [1, 128], strides = [1, 1]} : vector<8x128xf32> to vector<1x128xf32>
    %cst_62 = arith.constant dense<0.000000e+00> : vector<1x128xf32>
    %320 = tpu.matmul %318, %179, %cst_62 {dimension_numbers = #tpu.dot_dimension_numbers<[1], [0], [0], [1], [0, 0, 1, 1], [], []>} : vector<1x32xbf16>, vector<32x128xbf16>, vector<1x128xf32> -> vector<1x128xf32>
    %321 = arith.addf %319, %320 : vector<1x128xf32>
    %322 = arith.negf %321 : vector<1x128xf32>
    %323 = math.exp %322 : vector<1x128xf32>
    %cst_63 = arith.constant 1.000000e+00 : f32
    %324 = vector.broadcast %cst_63 : f32 to vector<1x128xf32>
    %325 = arith.addf %324, %323 : vector<1x128xf32>
    %326 = arith.divf %324, %325 : vector<1x128xf32>
    %327 = math.tanh %321 : vector<1x128xf32>
    %328 = vector.extract_strided_slice %326 {offsets = [0, 0], sizes = [1, 32], strides = [1, 1]} : vector<1x128xf32> to vector<1x32xf32>
    %329 = vector.extract_strided_slice %326 {offsets = [0, 32], sizes = [1, 32], strides = [1, 1]} : vector<1x128xf32> to vector<1x32xf32>
    %330 = vector.extract_strided_slice %327 {offsets = [0, 64], sizes = [1, 32], strides = [1, 1]} : vector<1x128xf32> to vector<1x32xf32>
    %331 = vector.extract_strided_slice %326 {offsets = [0, 96], sizes = [1, 32], strides = [1, 1]} : vector<1x128xf32> to vector<1x32xf32>
    %332 = arith.mulf %329, %315 : vector<1x32xf32>
    %333 = arith.mulf %328, %330 : vector<1x32xf32>
    %334 = arith.addf %332, %333 : vector<1x32xf32>
    %335 = math.tanh %334 : vector<1x32xf32>
    %336 = arith.mulf %331, %335 : vector<1x32xf32>
    %337 = arith.truncf %336 : vector<1x32xf32> to vector<1x32xbf16>
    %338 = tpu.concatenate %203, %222, %241, %260, %279, %298, %317, %336 in 0 : vector<1x32xf32>, vector<1x32xf32>, vector<1x32xf32>, vector<1x32xf32>, vector<1x32xf32>, vector<1x32xf32>, vector<1x32xf32>, vector<1x32xf32> -> vector<8x32xf32>
    %339 = arith.index_cast %183 : i32 to index
    %c0_64 = arith.constant 0 : index
    %340 = vector.load %arg10[%339, %c0_64] : memref<8x128xf32, #tpu.memory_space<vmem>>, vector<8x32xf32>
    tpu.vector_store %arg10[%339, %c0_64], %338 {strides = array<i32>} : memref<8x128xf32, #tpu.memory_space<vmem>>, vector<8x32xf32>,
    %c1_i32_65 = arith.constant 1 : i32
    %c0_66 = arith.constant 0 : index
    %c0_67 = arith.constant 0 : index
    %341 = vector.load %arg10[%c0_66, %c0_67] : memref<8x128xf32, #tpu.memory_space<vmem>>, vector<8x128xf32>
    %342 = arith.truncf %341 : vector<8x128xf32> to vector<8x128xbf16>
    %c0_68 = arith.constant 0 : index
    %c0_69 = arith.constant 0 : index
    %343 = vector.load %arg7[%c0_68, %c0_69] : memref<128x128xbf16, #tpu.memory_space<vmem>>, vector<128x128xbf16>
    %cst_70 = arith.constant dense<0.000000e+00> : vector<8x128xf32>
    %344 = tpu.matmul %342, %343, %cst_70 {dimension_numbers = #tpu.dot_dimension_numbers<[1], [0], [0], [1], [0, 0, 1, 1], [], []>} : vector<8x128xbf16>, vector<128x128xbf16>, vector<8x128xf32> -> vector<8x128xf32>
    %c0_71 = arith.constant 0 : index
    %c0_72 = arith.constant 0 : index
    %345 = vector.load %arg8[%c0_71, %c0_72] : memref<1x128xf32, #tpu.memory_space<vmem>>, vector<1x128xf32>
    %346 = vector.broadcast %345 : vector<1x128xf32> to vector<8x128xf32>
    %347 = arith.addf %344, %346 : vector<8x128xf32>
    %c0_73 = arith.constant 0 : index
    %c0_74 = arith.constant 0 : index
    %348 = vector.load %arg9[%c0_73, %c0_74] : memref<8x128xf32, #tpu.memory_space<vmem>>, vector<8x128xf32>
    tpu.vector_store %arg9[%c0_73, %c0_74], %347 {strides = array<i32>} : memref<8x128xf32, #tpu.memory_space<vmem>>, vector<8x128xf32>,
    return
  }
}

</mosaic_0001>

<llo_original>
// kernel: forward.1
$region0: #{forward.1}
  #allocation0 [shape = 'u32[]', space=smem, size = 0x4, offset = 0x4, fixed_abs, tag = 'smem constant byte address 0x4 - core index']
  #allocation1 [shape = 'u32[144,128]{1,0:T(1,128)}', space=vmem, size = 0x12000, scoped, tag = 'internal scratch']
  #allocation2 [shape = 'f32[8,128]{1,0:T(8,128)}', space=vmem, size = 0x1000, scoped, tag = 'scratch operand']
  #allocation3 [shape = 'f32[8,128]{1,0:T(8,128)}', space=vmem, size = 0x1000, scoped, tag = 'scratch operand']
  %s0 = inlined_call_operand.vmem [shape: bf16[8,128], index: 0, kind: input, shape index: {}]
  %s1 = inlined_call_operand.hbm [shape: bf16[128,128], index: 1, kind: input, shape index: {}]
  %s2 = inlined_call_operand.vmem [shape: bf16[32,128], index: 2, kind: input, shape index: {}]
  %s3 = inlined_call_operand.hbm [shape: f32[1,128], index: 3, kind: input, shape index: {}]
  %s4 = inlined_call_operand.hbm [shape: bf16[128,128], index: 4, kind: input, shape index: {}]
  %s5 = inlined_call_operand.vmem [shape: bf16[32,128], index: 5, kind: input, shape index: {}]
  %s6 = inlined_call_operand.vmem [shape: f32[1,128], index: 6, kind: input, shape index: {}]
  %s7 = inlined_call_operand.hbm [shape: bf16[128,128], index: 7, kind: input, shape index: {}]
  %s8 = inlined_call_operand.vmem [shape: f32[1,128], index: 8, kind: input, shape index: {}]
  %s9 = inlined_call_operand.hbm [shape: f32[8,128], index: 9, kind: output, shape index: {}]
  %s10 = sld [smem:[#allocation0]]
  $region62: #{forward.1} parent=0
    _
  %s12 = ssub.s32 1, %s10
  %s13 = scalar_select 0, %s12, %s10
  $region1: #{forward.1} parent=0
    #allocation4 [shape = 'u8[32768]{0}', space=vmem, size = 0x8000, scoped, tag = 'input window, operand 1, single buffered']
    #allocation5 [shape = 's32[1]{0}', space=sflag, size = 0x4, scoped, tag = 'scoped memory for forward.1']
    #allocation6 [shape = 's32[1]{0}', space=sflag, size = 0x4, scoped, tag = 'scoped memory for forward.1']
    #allocation7 [shape = 'u8[512]{0}', space=vmem, size = 0x400, scoped, tag = 'input window, operand 3, single buffered']
    #allocation8 [shape = 's32[1]{0}', space=sflag, size = 0x4, scoped, tag = 'scoped memory for forward.1']
    #allocation9 [shape = 'u8[32768]{0}', space=vmem, size = 0x8000, scoped, tag = 'input window, operand 4, single buffered']
    #allocation10 [shape = 'u8[32768]{0}', space=vmem, size = 0x8000, scoped, tag = 'input window, operand 7, single buffered']
    #allocation11 [shape = 's32[1]{0}', space=sflag, size = 0x4, scoped, tag = 'scoped memory for forward.1']
    #allocation12 [shape = 'u8[4096]{0}', space=vmem, size = 0x1000, scoped, tag = 'output window, operand 0, single buffered']
    %14 = vsyncpa [#allocation5], 0
    %15 = vsyncpa [#allocation8], 0
    %16 = vsyncpa [#allocation11], 0
    %17 = vsyncpa [#allocation6], 0
    // Predicated region
    $region2: #{forward.1} parent=1 // pred_check
      _
    $region3: #{forward.1} parent=1 // pred_check_branch
      %19 = sbr.rel (0) target = $region5
    $region4: #{forward.1} parent=1 // pred_region
      _
    $region5: #{forward.1} parent=1 // pred_fallthru
      _
    // Predicated region
    $region6: #{forward.1} parent=1 // pred_check
      _
    $region7: #{forward.1} parent=1 // pred_check_branch
      %21 = sbr.rel (0) target = $region9
    $region8: #{forward.1} parent=1 // pred_region
      %s23 = ssub.s32 1024, 1024
      %24 = vsyncadd [#allocation5], %s23
      %s25 = sshll.u32 [#allocation4], 4
      %s26 = int_to_ptr.vmem [resolvable:$true] %s25
      %31 = dma.hbm_to_vmem [thread:$0]  %s1, 1024, %s26, [#allocation5], 64, 64, 4
    $region9: #{forward.1} parent=1 // pred_fallthru
      _
    // Predicated region
    $region10: #{forward.1} parent=1 // pred_check
      _
    $region11: #{forward.1} parent=1 // pred_check_branch
      %33 = sbr.rel (0) target = $region13
    $region12: #{forward.1} parent=1 // pred_region
      _
    $region13: #{forward.1} parent=1 // pred_fallthru
      _
    // Predicated region
    $region14: #{forward.1} parent=1 // pred_check
      _
    $region15: #{forward.1} parent=1 // pred_check_branch
      %35 = sbr.rel (0) target = $region17
    $region16: #{forward.1} parent=1 // pred_region
      %s37 = ssub.s32 16, 16
      %38 = vsyncadd [#allocation8], %s37
      %s40 = sshll.u32 [#allocation7], 4
      %s41 = int_to_ptr.vmem [resolvable:$true] %s40
      %43 = dma.hbm_to_vmem [thread:$0]  %s3, 16, %s41, [#allocation8]
    $region17: #{forward.1} parent=1 // pred_fallthru
      _
    // Predicated region
    $region18: #{forward.1} parent=1 // pred_check
      _
    $region19: #{forward.1} parent=1 // pred_check_branch
      %45 = sbr.rel (0) target = $region21
    $region20: #{forward.1} parent=1 // pred_region
      %s47 = ssub.s32 1024, 1024
      %48 = vsyncadd [#allocation8], %s47
      %s49 = sshll.u32 [#allocation9], 4
      %s50 = int_to_ptr.vmem [resolvable:$true] %s49
      %55 = dma.hbm_to_vmem [thread:$0]  %s4, 1024, %s50, [#allocation8], 64, 64, 4
    $region21: #{forward.1} parent=1 // pred_fallthru
      _
    // Predicated region
    $region22: #{forward.1} parent=1 // pred_check
      _
    $region23: #{forward.1} parent=1 // pred_check_branch
      %57 = sbr.rel (0) target = $region25
    $region24: #{forward.1} parent=1 // pred_region
      _
    $region25: #{forward.1} parent=1 // pred_fallthru
      _
    // Predicated region
    $region26: #{forward.1} parent=1 // pred_check
      _
    $region27: #{forward.1} parent=1 // pred_check_branch
      %59 = sbr.rel (0) target = $region29
    $region28: #{forward.1} parent=1 // pred_region
      _
    $region29: #{forward.1} parent=1 // pred_fallthru
      _
    // Predicated region
    $region30: #{forward.1} parent=1 // pred_check
      _
    $region31: #{forward.1} parent=1 // pred_check_branch
      %61 = sbr.rel (0) target = $region33
    $region32: #{forward.1} parent=1 // pred_region
      %s63 = ssub.s32 1024, 1024
      %64 = vsyncadd [#allocation11], %s63
      %s65 = sshll.u32 [#allocation10], 4
      %s66 = int_to_ptr.vmem [resolvable:$true] %s65
      %71 = dma.hbm_to_vmem [thread:$0]  %s7, 1024, %s66, [#allocation11], 64, 64, 4
    $region33: #{forward.1} parent=1 // pred_fallthru
      _
    // Predicated region
    $region34: #{forward.1} parent=1 // pred_check
      _
    $region35: #{forward.1} parent=1 // pred_check_branch
      %73 = sbr.rel (0) target = $region37
    $region36: #{forward.1} parent=1 // pred_region
      _
    $region37: #{forward.1} parent=1 // pred_fallthru
      _
    // Predicated region
    $region38: #{forward.1} parent=1 // pred_check
      _
    $region39: #{forward.1} parent=1 // pred_check_branch
      %75 = sbr.rel (0) target = $region41
    $region40: #{forward.1} parent=1 // pred_region
      %76 = dma.done [#allocation5], 1024
    $region41: #{forward.1} parent=1 // pred_fallthru
      _
    // Predicated region
    $region42: #{forward.1} parent=1 // pred_check
      _
    $region43: #{forward.1} parent=1 // pred_check_branch
      %78 = sbr.rel (0) target = $region45
    $region44: #{forward.1} parent=1 // pred_region
      %79 = dma.done [#allocation8], 16
    $region45: #{forward.1} parent=1 // pred_fallthru
      _
    // Predicated region
    $region46: #{forward.1} parent=1 // pred_check
      _
    $region47: #{forward.1} parent=1 // pred_check_branch
      %81 = sbr.rel (0) target = $region49
    $region48: #{forward.1} parent=1 // pred_region
      %82 = dma.done [#allocation8], 1024
    $region49: #{forward.1} parent=1 // pred_fallthru
      _
    // Predicated region
    $region50: #{forward.1} parent=1 // pred_check
      _
    $region51: #{forward.1} parent=1 // pred_check_branch
      %84 = sbr.rel (0) target = $region53
    $region52: #{forward.1} parent=1 // pred_region
      %85 = dma.done [#allocation11], 1024
    $region53: #{forward.1} parent=1 // pred_fallthru
      _
    %87 = vst [vmem:[#allocation2] sm:$0xff] 0.0
    %v88 = vld [vmem:[%s0] sm:$0xf]
    %v89 = vld [vmem:[#allocation4] sm:$0xf]
    %v90 = vld [vmem:[#allocation4 + $0x4] sm:$0xf]
    %v91 = vld [vmem:[#allocation4 + $0x8] sm:$0xf]
    %v92 = vld [vmem:[#allocation4 + $0xc] sm:$0xf]
    %v93 = vld [vmem:[#allocation4 + $0x10] sm:$0xf]
    %v94 = vld [vmem:[#allocation4 + $0x14] sm:$0xf]
    %v95 = vld [vmem:[#allocation4 + $0x18] sm:$0xf]
    %v96 = vld [vmem:[#allocation4 + $0x1c] sm:$0xf]
    %v97 = vld [vmem:[#allocation4 + $0x20] sm:$0xf]
    %v98 = vld [vmem:[#allocation4 + $0x24] sm:$0xf]
    %v99 = vld [vmem:[#allocation4 + $0x28] sm:$0xf]
    %v100 = vld [vmem:[#allocation4 + $0x2c] sm:$0xf]
    %v101 = vld [vmem:[#allocation4 + $0x30] sm:$0xf]
    %v102 = vld [vmem:[#allocation4 + $0x34] sm:$0xf]
    %v103 = vld [vmem:[#allocation4 + $0x38] sm:$0xf]
    %v104 = vld [vmem:[#allocation4 + $0x3c] sm:$0xf]
    %v105 = vld [vmem:[#allocation7] sm:$0x1]
    %v107 = vlaneseq
    %v108 = vshrl.u32 %v107, 7
    %v109 = vsub.s32 0, %v108
    %v110 = vrot.slane %v105, %v109
    %v128 = vunpack.c.l.b16 %v89
    %v129 = vunpack.c.l.b16 %v90
    %v130 = vunpack.c.l.b16 %v91
    %v131 = vunpack.c.l.b16 %v92
    %v132 = vunpack.c.l.b16 %v93
    %v133 = vunpack.c.l.b16 %v94
    %v134 = vunpack.c.l.b16 %v95
    %v135 = vunpack.c.l.b16 %v96
    %v136 = vunpack.c.l.b16 %v97
    %v137 = vunpack.c.l.b16 %v98
    %v138 = vunpack.c.l.b16 %v99
    %v139 = vunpack.c.l.b16 %v100
    %v140 = vunpack.c.l.b16 %v101
    %v141 = vunpack.c.l.b16 %v102
    %v142 = vunpack.c.l.b16 %v103
    %v143 = vunpack.c.l.b16 %v104
    %v144 = vpack.c.b16 %v129, %v128
    %v145 = vpack.c.b16 %v131, %v130
    %v146 = vpack.c.b16 %v133, %v132
    %v147 = vpack.c.b16 %v135, %v134
    %v148 = vpack.c.b16 %v137, %v136
    %v149 = vpack.c.b16 %v139, %v138
    %v150 = vpack.c.b16 %v141, %v140
    %v151 = vpack.c.b16 %v143, %v142
    %160 = vmatprep.subr.bf16.mxu0 0
    %161 = vmatpush1.bf16.msra.mxu0 %v151
    %162 = vmatprep.subr.bf16.mxu0 0
    %163 = vmatpush1.bf16.msra.mxu0 %v150
    %164 = vmatprep.subr.bf16.mxu0 0
    %165 = vmatpush1.bf16.msra.mxu0 %v149
    %166 = vmatprep.subr.bf16.mxu0 0
    %167 = vmatpush1.bf16.msra.mxu0 %v148
    %168 = vmatprep.subr.bf16.mxu0 0
    %169 = vmatpush1.bf16.msra.mxu0 %v147
    %170 = vmatprep.subr.bf16.mxu0 0
    %171 = vmatpush1.bf16.msra.mxu0 %v146
    %172 = vmatprep.subr.bf16.mxu0 0
    %173 = vmatpush1.bf16.msra.mxu0 %v145
    %174 = vmatprep.subr.bf16.mxu0 0
    %175 = vmatpush1.bf16.msra.mxu0 %v144
    %176 = vmatprep.subr.bf16.mxu0 0
    %177 = vmatpush2.bf16.msra.mxu0 0
    %178 = vmatprep.subr.bf16.mxu0 0
    %179 = vmatpush2.bf16.msra.mxu0 0
    %180 = vmatprep.subr.bf16.mxu0 0
    %181 = vmatpush2.bf16.msra.mxu0 0
    %182 = vmatprep.subr.bf16.mxu0 0
    %183 = vmatpush2.bf16.msra.mxu0 0
    %184 = vmatprep.subr.bf16.mxu0 0
    %185 = vmatpush2.bf16.msra.mxu0 0
    %186 = vmatprep.subr.bf16.mxu0 0
    %187 = vmatpush2.bf16.msra.mxu0 0
    %188 = vmatprep.subr.bf16.mxu0 0
    %189 = vmatpush2.bf16.msra.mxu0 0
    %190 = vmatprep.subr.bf16.mxu0 0
    %191 = vmatpush2.bf16.msra.mxu0 0
    %192 = vmatprep.mubr.bf16.mxu0 0
    %193 = vmatmul.mubr.bf16.gmra.mxu0 %v88
    %v194 = vpop.f32.mrf.mxu0
    %v195 = vadd.f32 %v110, %v194
    %v196 = vpop.f32.mrf.mxu0
    %v197 = vpop.f32.mrf.mxu0
    %v198 = vpop.f32.mrf.mxu0
    %199 = vdwg.mxu0
    %200 = vst [vmem:[#allocation3] sm:$0xff] %v195
    %v201 = vld [vmem:[%s2] sm:$0xf]
    %v202 = vld [vmem:[%s2 + $0x4] sm:$0xf]
    %v203 = vld [vmem:[%s2 + $0x8] sm:$0xf]
    %v204 = vld [vmem:[%s2 + $0xc] sm:$0xf]
    %v205 = vld [vmem:[#allocation3] sm:$0xff]
    %v210 = vunpack.c.l.b16 %v201
    %v211 = vunpack.c.l.b16 %v202
    %v212 = vunpack.c.l.b16 %v203
    %v213 = vunpack.c.l.b16 %v204
    %v214 = vpack.c.b16 %v211, %v210
    %v215 = vpack.c.b16 %v213, %v212
    %vm218 = vcmask 261120
    %v220 = vsel %vm218, 0, 0
    %222 = vmatprep.subr.bf16.mxu0 0
    %223 = vmatpush1.bf16.msra.mxu0 0
    %224 = vmatprep.subr.bf16.mxu0 0
    %225 = vmatpush1.bf16.msra.mxu0 0
    %226 = vmatprep.subr.bf16.mxu0 0
    %227 = vmatpush1.bf16.msra.mxu0 0
    %228 = vmatprep.subr.bf16.mxu0 0
    %229 = vmatpush1.bf16.msra.mxu0 0
    %230 = vmatprep.subr.bf16.mxu0 0
    %231 = vmatpush1.bf16.msra.mxu0 0
    %232 = vmatprep.subr.bf16.mxu0 0
    %233 = vmatpush1.bf16.msra.mxu0 0
    %234 = vmatprep.subr.bf16.mxu0 0
    %235 = vmatpush1.bf16.msra.mxu0 %v215
    %236 = vmatprep.subr.bf16.mxu0 0
    %237 = vmatpush1.bf16.msra.mxu0 %v214
    %238 = vmatprep.subr.bf16.mxu0 0
    %239 = vmatpush2.bf16.msra.mxu0 0
    %240 = vmatprep.subr.bf16.mxu0 0
    %241 = vmatpush2.bf16.msra.mxu0 0
    %242 = vmatprep.subr.bf16.mxu0 0
    %243 = vmatpush2.bf16.msra.mxu0 0
    %244 = vmatprep.subr.bf16.mxu0 0
    %245 = vmatpush2.bf16.msra.mxu0 0
    %246 = vmatprep.subr.bf16.mxu0 0
    %247 = vmatpush2.bf16.msra.mxu0 0
    %248 = vmatprep.subr.bf16.mxu0 0
    %249 = vmatpush2.bf16.msra.mxu0 0
    %250 = vmatprep.subr.bf16.mxu0 0
    %251 = vmatpush2.bf16.msra.mxu0 0
    %252 = vmatprep.subr.bf16.mxu0 0
    %253 = vmatpush2.bf16.msra.mxu0 0
    %254 = vmatprep.mubr.bf16.mxu0 0
    %255 = vmatmul.mubr.bf16.gmra.mxu0 %v220
    %v256 = vpop.f32.mrf.mxu0
    %v257 = vadd.f32 0.0, %v256
    %v258 = vpop.f32.mrf.mxu0
    %v259 = vpop.f32.mrf.mxu0
    %v260 = vpop.f32.mrf.mxu0
    %261 = vdwg.mxu0
    %v262 = vadd.f32 %v205, %v257
    %v263 = vxor.u32 %v262, 2147483648
    %v264 = vmul.f32 %v263, 1.442695
    %v265 = vpow.pop %v264
    %v266 = vadd.f32 %v265, 1.0
    %v267 = vrcp.pop %v266
    %v268 = vmul.f32 1.0, %v267
    %v269 = vtanh.pop %v262
    %v270 = vmul.f32 %v268, 0.0
    %272 = vrot.lane.b32.xlu0 %v269, 64
    %v273 = vpop.permute.xlu0 %272
    %v275 = vmul.f32 %v268, %v273
    %277 = vrot.lane.b32.xlu0 %v275, 32
    %v278 = vpop.permute.xlu0 %277
    %v280 = vadd.f32 %v270, %v278
    %v281 = vtanh.pop %v280
    %283 = vrot.lane.b32.xlu0 %v281, 64
    %v284 = vpop.permute.xlu0 %283
    %v286 = vmul.f32 %v268, %v284
    %v287 = vpack.c.bf16 %v286, %v286
    %289 = vrot.lane.b32.xlu0 %v287, 32
    %v290 = vpop.permute.xlu0 %289
    %v292 = vsel %vm218, %v290, 0
    %294 = vmatprep.subr.bf16.mxu0 0
    %295 = vmatpush1.bf16.msra.mxu0 0
    %296 = vmatprep.subr.bf16.mxu0 0
    %297 = vmatpush1.bf16.msra.mxu0 0
    %298 = vmatprep.subr.bf16.mxu0 0
    %299 = vmatpush1.bf16.msra.mxu0 0
    %300 = vmatprep.subr.bf16.mxu0 0
    %301 = vmatpush1.bf16.msra.mxu0 0
    %302 = vmatprep.subr.bf16.mxu0 0
    %303 = vmatpush1.bf16.msra.mxu0 0
    %304 = vmatprep.subr.bf16.mxu0 0
    %305 = vmatpush1.bf16.msra.mxu0 0
    %306 = vmatprep.subr.bf16.mxu0 0
    %307 = vmatpush1.bf16.msra.mxu0 %v215
    %308 = vmatprep.subr.bf16.mxu0 0
    %309 = vmatpush1.bf16.msra.mxu0 %v214
    %310 = vmatprep.subr.bf16.mxu0 0
    %311 = vmatpush2.bf16.msra.mxu0 0
    %312 = vmatprep.subr.bf16.mxu0 0
    %313 = vmatpush2.bf16.msra.mxu0 0
    %314 = vmatprep.subr.bf16.mxu0 0
    %315 = vmatpush2.bf16.msra.mxu0 0
    %316 = vmatprep.subr.bf16.mxu0 0
    %317 = vmatpush2.bf16.msra.mxu0 0
    %318 = vmatprep.subr.bf16.mxu0 0
    %319 = vmatpush2.bf16.msra.mxu0 0
    %320 = vmatprep.subr.bf16.mxu0 0
    %321 = vmatpush2.bf16.msra.mxu0 0
    %322 = vmatprep.subr.bf16.mxu0 0
    %323 = vmatpush2.bf16.msra.mxu0 0
    %324 = vmatprep.subr.bf16.mxu0 0
    %325 = vmatpush2.bf16.msra.mxu0 0
    %326 = vmatprep.mubr.bf16.mxu0 0
    %327 = vmatmul.mubr.bf16.gmra.mxu0 %v292
    %v328 = vpop.f32.mrf.mxu0
    %v329 = vadd.f32 0.0, %v328
    %v330 = vpop.f32.mrf.mxu0
    %v331 = vpop.f32.mrf.mxu0
    %v332 = vpop.f32.mrf.mxu0
    %333 = vdwg.mxu0
    %v335 = vrot.slane %v329, 7
    %v337 = vadd.f32 %v205, %v335
    %v338 = vxor.u32 %v337, 2147483648
    %v339 = vmul.f32 %v338, 1.442695
    %v340 = vpow.pop %v339
    %v341 = vadd.f32 %v340, 1.0
    %v342 = vrcp.pop %v341
    %v343 = vmul.f32 1.0, %v342
    %v344 = vtanh.pop %v337
    %v346 = vrot.slane %v280, 7
    %v348 = vmul.f32 %v343, %v346
    %350 = vrot.lane.b32.xlu0 %v344, 64
    %v351 = vpop.permute.xlu0 %350
    %v353 = vmul.f32 %v343, %v351
    %355 = vrot.lane.b32.xlu0 %v353, 32
    %v356 = vpop.permute.xlu0 %355
    %v358 = vadd.f32 %v348, %v356
    %v359 = vtanh.pop %v358
    %361 = vrot.lane.b32.xlu0 %v359, 64
    %v362 = vpop.permute.xlu0 %361
    %v364 = vmul.f32 %v343, %v362
    %v365 = vpack.c.bf16 %v364, %v364
    %v367 = vshrl.u32 %v365, 16
    %369 = vrot.lane.b32.xlu0 %v367, 32
    %v370 = vpop.permute.xlu0 %369
    %v372 = vsel %vm218, %v370, 0
    %374 = vmatprep.subr.bf16.mxu0 0
    %375 = vmatpush1.bf16.msra.mxu0 0
    %376 = vmatprep.subr.bf16.mxu0 0
    %377 = vmatpush1.bf16.msra.mxu0 0
    %378 = vmatprep.subr.bf16.mxu0 0
    %379 = vmatpush1.bf16.msra.mxu0 0
    %380 = vmatprep.subr.bf16.mxu0 0
    %381 = vmatpush1.bf16.msra.mxu0 0
    %382 = vmatprep.subr.bf16.mxu0 0
    %383 = vmatpush1.bf16.msra.mxu0 0
    %384 = vmatprep.subr.bf16.mxu0 0
    %385 = vmatpush1.bf16.msra.mxu0 0
    %386 = vmatprep.subr.bf16.mxu0 0
    %387 = vmatpush1.bf16.msra.mxu0 %v215
    %388 = vmatprep.subr.bf16.mxu0 0
    %389 = vmatpush1.bf16.msra.mxu0 %v214
    %390 = vmatprep.subr.bf16.mxu0 0
    %391 = vmatpush2.bf16.msra.mxu0 0
    %392 = vmatprep.subr.bf16.mxu0 0
    %393 = vmatpush2.bf16.msra.mxu0 0
    %394 = vmatprep.subr.bf16.mxu0 0
    %395 = vmatpush2.bf16.msra.mxu0 0
    %396 = vmatprep.subr.bf16.mxu0 0
    %397 = vmatpush2.bf16.msra.mxu0 0
    %398 = vmatprep.subr.bf16.mxu0 0
    %399 = vmatpush2.bf16.msra.mxu0 0
    %400 = vmatprep.subr.bf16.mxu0 0
    %401 = vmatpush2.bf16.msra.mxu0 0
    %402 = vmatprep.subr.bf16.mxu0 0
    %403 = vmatpush2.bf16.msra.mxu0 0
    %404 = vmatprep.subr.bf16.mxu0 0
    %405 = vmatpush2.bf16.msra.mxu0 0
    %406 = vmatprep.mubr.bf16.mxu0 0
    %407 = vmatmul.mubr.bf16.gmra.mxu0 %v372
    %v408 = vpop.f32.mrf.mxu0
    %v409 = vadd.f32 0.0, %v408
    %v410 = vpop.f32.mrf.mxu0
    %v411 = vpop.f32.mrf.mxu0
    %v412 = vpop.f32.mrf.mxu0
    %413 = vdwg.mxu0
    %v415 = vrot.slane %v409, 6
    %v417 = vadd.f32 %v205, %v415
    %v418 = vxor.u32 %v417, 2147483648
    %v419 = vmul.f32 %v418, 1.442695
    %v420 = vpow.pop %v419
    %v421 = vadd.f32 %v420, 1.0
    %v422 = vrcp.pop %v421
    %v423 = vmul.f32 1.0, %v422
    %v424 = vtanh.pop %v417
    %v426 = vrot.slane %v358, 7
    %v428 = vmul.f32 %v423, %v426
    %430 = vrot.lane.b32.xlu0 %v424, 64
    %v431 = vpop.permute.xlu0 %430
    %v433 = vmul.f32 %v423, %v431
    %435 = vrot.lane.b32.xlu0 %v433, 32
    %v436 = vpop.permute.xlu0 %435
    %v438 = vadd.f32 %v428, %v436
    %v439 = vtanh.pop %v438
    %441 = vrot.lane.b32.xlu0 %v439, 64
    %v442 = vpop.permute.xlu0 %441
    %v444 = vmul.f32 %v423, %v442
    %v445 = vpack.c.bf16 %v444, %v444
    %v447 = vrot.slane %v445, 1
    %448 = vrot.lane.b32.xlu0 %v447, 32
    %v449 = vpop.permute.xlu0 %448
    %v451 = vsel %vm218, %v449, 0
    %453 = vmatprep.subr.bf16.mxu0 0
    %454 = vmatpush1.bf16.msra.mxu0 0
    %455 = vmatprep.subr.bf16.mxu0 0
    %456 = vmatpush1.bf16.msra.mxu0 0
    %457 = vmatprep.subr.bf16.mxu0 0
    %458 = vmatpush1.bf16.msra.mxu0 0
    %459 = vmatprep.subr.bf16.mxu0 0
    %460 = vmatpush1.bf16.msra.mxu0 0
    %461 = vmatprep.subr.bf16.mxu0 0
    %462 = vmatpush1.bf16.msra.mxu0 0
    %463 = vmatprep.subr.bf16.mxu0 0
    %464 = vmatpush1.bf16.msra.mxu0 0
    %465 = vmatprep.subr.bf16.mxu0 0
    %466 = vmatpush1.bf16.msra.mxu0 %v215
    %467 = vmatprep.subr.bf16.mxu0 0
    %468 = vmatpush1.bf16.msra.mxu0 %v214
    %469 = vmatprep.subr.bf16.mxu0 0
    %470 = vmatpush2.bf16.msra.mxu0 0
    %471 = vmatprep.subr.bf16.mxu0 0
    %472 = vmatpush2.bf16.msra.mxu0 0
    %473 = vmatprep.subr.bf16.mxu0 0
    %474 = vmatpush2.bf16.msra.mxu0 0
    %475 = vmatprep.subr.bf16.mxu0 0
    %476 = vmatpush2.bf16.msra.mxu0 0
    %477 = vmatprep.subr.bf16.mxu0 0
    %478 = vmatpush2.bf16.msra.mxu0 0
    %479 = vmatprep.subr.bf16.mxu0 0
    %480 = vmatpush2.bf16.msra.mxu0 0
    %481 = vmatprep.subr.bf16.mxu0 0
    %482 = vmatpush2.bf16.msra.mxu0 0
    %483 = vmatprep.subr.bf16.mxu0 0
    %484 = vmatpush2.bf16.msra.mxu0 0
    %485 = vmatprep.mubr.bf16.mxu0 0
    %486 = vmatmul.mubr.bf16.gmra.mxu0 %v451
    %v487 = vpop.f32.mrf.mxu0
    %v488 = vadd.f32 0.0, %v487
    %v489 = vpop.f32.mrf.mxu0
    %v490 = vpop.f32.mrf.mxu0
    %v491 = vpop.f32.mrf.mxu0
    %492 = vdwg.mxu0
    %v494 = vrot.slane %v488, 5
    %v496 = vadd.f32 %v205, %v494
    %v497 = vxor.u32 %v496, 2147483648
    %v498 = vmul.f32 %v497, 1.442695
    %v499 = vpow.pop %v498
    %v500 = vadd.f32 %v499, 1.0
    %v501 = vrcp.pop %v500
    %v502 = vmul.f32 1.0, %v501
    %v503 = vtanh.pop %v496
    %v505 = vrot.slane %v438, 7
    %v507 = vmul.f32 %v502, %v505
    %509 = vrot.lane.b32.xlu0 %v503, 64
    %v510 = vpop.permute.xlu0 %509
    %v512 = vmul.f32 %v502, %v510
    %514 = vrot.lane.b32.xlu0 %v512, 32
    %v515 = vpop.permute.xlu0 %514
    %v517 = vadd.f32 %v507, %v515
    %v518 = vtanh.pop %v517
    %520 = vrot.lane.b32.xlu0 %v518, 64
    %v521 = vpop.permute.xlu0 %520
    %v523 = vmul.f32 %v502, %v521
    %v524 = vpack.c.bf16 %v523, %v523
    %v526 = vshrl.u32 %v524, 16
    %v528 = vrot.slane %v526, 1
    %529 = vrot.lane.b32.xlu0 %v528, 32
    %v530 = vpop.permute.xlu0 %529
    %v532 = vsel %vm218, %v530, 0
    %534 = vmatprep.subr.bf16.mxu0 0
    %535 = vmatpush1.bf16.msra.mxu0 0
    %536 = vmatprep.subr.bf16.mxu0 0
    %537 = vmatpush1.bf16.msra.mxu0 0
    %538 = vmatprep.subr.bf16.mxu0 0
    %539 = vmatpush1.bf16.msra.mxu0 0
    %540 = vmatprep.subr.bf16.mxu0 0
    %541 = vmatpush1.bf16.msra.mxu0 0
    %542 = vmatprep.subr.bf16.mxu0 0
    %543 = vmatpush1.bf16.msra.mxu0 0
    %544 = vmatprep.subr.bf16.mxu0 0
    %545 = vmatpush1.bf16.msra.mxu0 0
    %546 = vmatprep.subr.bf16.mxu0 0
    %547 = vmatpush1.bf16.msra.mxu0 %v215
    %548 = vmatprep.subr.bf16.mxu0 0
    %549 = vmatpush1.bf16.msra.mxu0 %v214
    %550 = vmatprep.subr.bf16.mxu0 0
    %551 = vmatpush2.bf16.msra.mxu0 0
    %552 = vmatprep.subr.bf16.mxu0 0
    %553 = vmatpush2.bf16.msra.mxu0 0
    %554 = vmatprep.subr.bf16.mxu0 0
    %555 = vmatpush2.bf16.msra.mxu0 0
    %556 = vmatprep.subr.bf16.mxu0 0
    %557 = vmatpush2.bf16.msra.mxu0 0
    %558 = vmatprep.subr.bf16.mxu0 0
    %559 = vmatpush2.bf16.msra.mxu0 0
    %560 = vmatprep.subr.bf16.mxu0 0
    %561 = vmatpush2.bf16.msra.mxu0 0
    %562 = vmatprep.subr.bf16.mxu0 0
    %563 = vmatpush2.bf16.msra.mxu0 0
    %564 = vmatprep.subr.bf16.mxu0 0
    %565 = vmatpush2.bf16.msra.mxu0 0
    %566 = vmatprep.mubr.bf16.mxu0 0
    %567 = vmatmul.mubr.bf16.gmra.mxu0 %v532
    %v568 = vpop.f32.mrf.mxu0
    %v569 = vadd.f32 0.0, %v568
    %v570 = vpop.f32.mrf.mxu0
    %v571 = vpop.f32.mrf.mxu0
    %v572 = vpop.f32.mrf.mxu0
    %573 = vdwg.mxu0
    %v575 = vrot.slane %v569, 4
    %v577 = vadd.f32 %v205, %v575
    %v578 = vxor.u32 %v577, 2147483648
    %v579 = vmul.f32 %v578, 1.442695
    %v580 = vpow.pop %v579
    %v581 = vadd.f32 %v580, 1.0
    %v582 = vrcp.pop %v581
    %v583 = vmul.f32 1.0, %v582
    %v584 = vtanh.pop %v577
    %v586 = vrot.slane %v517, 7
    %v588 = vmul.f32 %v583, %v586
    %590 = vrot.lane.b32.xlu0 %v584, 64
    %v591 = vpop.permute.xlu0 %590
    %v593 = vmul.f32 %v583, %v591
    %595 = vrot.lane.b32.xlu0 %v593, 32
    %v596 = vpop.permute.xlu0 %595
    %v598 = vadd.f32 %v588, %v596
    %v599 = vtanh.pop %v598
    %601 = vrot.lane.b32.xlu0 %v599, 64
    %v602 = vpop.permute.xlu0 %601
    %v604 = vmul.f32 %v583, %v602
    %v605 = vpack.c.bf16 %v604, %v604
    %v607 = vrot.slane %v605, 2
    %608 = vrot.lane.b32.xlu0 %v607, 32
    %v609 = vpop.permute.xlu0 %608
    %v611 = vsel %vm218, %v609, 0
    %613 = vmatprep.subr.bf16.mxu0 0
    %614 = vmatpush1.bf16.msra.mxu0 0
    %615 = vmatprep.subr.bf16.mxu0 0
    %616 = vmatpush1.bf16.msra.mxu0 0
    %617 = vmatprep.subr.bf16.mxu0 0
    %618 = vmatpush1.bf16.msra.mxu0 0
    %619 = vmatprep.subr.bf16.mxu0 0
    %620 = vmatpush1.bf16.msra.mxu0 0
    %621 = vmatprep.subr.bf16.mxu0 0
    %622 = vmatpush1.bf16.msra.mxu0 0
    %623 = vmatprep.subr.bf16.mxu0 0
    %624 = vmatpush1.bf16.msra.mxu0 0
    %625 = vmatprep.subr.bf16.mxu0 0
    %626 = vmatpush1.bf16.msra.mxu0 %v215
    %627 = vmatprep.subr.bf16.mxu0 0
    %628 = vmatpush1.bf16.msra.mxu0 %v214
    %629 = vmatprep.subr.bf16.mxu0 0
    %630 = vmatpush2.bf16.msra.mxu0 0
    %631 = vmatprep.subr.bf16.mxu0 0
    %632 = vmatpush2.bf16.msra.mxu0 0
    %633 = vmatprep.subr.bf16.mxu0 0
    %634 = vmatpush2.bf16.msra.mxu0 0
    %635 = vmatprep.subr.bf16.mxu0 0
    %636 = vmatpush2.bf16.msra.mxu0 0
    %637 = vmatprep.subr.bf16.mxu0 0
    %638 = vmatpush2.bf16.msra.mxu0 0
    %639 = vmatprep.subr.bf16.mxu0 0
    %640 = vmatpush2.bf16.msra.mxu0 0
    %641 = vmatprep.subr.bf16.mxu0 0
    %642 = vmatpush2.bf16.msra.mxu0 0
    %643 = vmatprep.subr.bf16.mxu0 0
    %644 = vmatpush2.bf16.msra.mxu0 0
    %645 = vmatprep.mubr.bf16.mxu0 0
    %646 = vmatmul.mubr.bf16.gmra.mxu0 %v611
    %v647 = vpop.f32.mrf.mxu0
    %v648 = vadd.f32 0.0, %v647
    %v649 = vpop.f32.mrf.mxu0
    %v650 = vpop.f32.mrf.mxu0
    %v651 = vpop.f32.mrf.mxu0
    %652 = vdwg.mxu0
    %v654 = vrot.slane %v648, 3
    %v656 = vadd.f32 %v205, %v654
    %v657 = vxor.u32 %v656, 2147483648
    %v658 = vmul.f32 %v657, 1.442695
    %v659 = vpow.pop %v658
    %v660 = vadd.f32 %v659, 1.0
    %v661 = vrcp.pop %v660
    %v662 = vmul.f32 1.0, %v661
    %v663 = vtanh.pop %v656
    %v665 = vrot.slane %v598, 7
    %v667 = vmul.f32 %v662, %v665
    %669 = vrot.lane.b32.xlu0 %v663, 64
    %v670 = vpop.permute.xlu0 %669
    %v672 = vmul.f32 %v662, %v670
    %674 = vrot.lane.b32.xlu0 %v672, 32
    %v675 = vpop.permute.xlu0 %674
    %v677 = vadd.f32 %v667, %v675
    %v678 = vtanh.pop %v677
    %680 = vrot.lane.b32.xlu0 %v678, 64
    %v681 = vpop.permute.xlu0 %680
    %v683 = vmul.f32 %v662, %v681
    %v684 = vpack.c.bf16 %v683, %v683
    %v686 = vshrl.u32 %v684, 16
    %v688 = vrot.slane %v686, 2
    %689 = vrot.lane.b32.xlu0 %v688, 32
    %v690 = vpop.permute.xlu0 %689
    %v692 = vsel %vm218, %v690, 0
    %694 = vmatprep.subr.bf16.mxu0 0
    %695 = vmatpush1.bf16.msra.mxu0 0
    %696 = vmatprep.subr.bf16.mxu0 0
    %697 = vmatpush1.bf16.msra.mxu0 0
    %698 = vmatprep.subr.bf16.mxu0 0
    %699 = vmatpush1.bf16.msra.mxu0 0
    %700 = vmatprep.subr.bf16.mxu0 0
    %701 = vmatpush1.bf16.msra.mxu0 0
    %702 = vmatprep.subr.bf16.mxu0 0
    %703 = vmatpush1.bf16.msra.mxu0 0
    %704 = vmatprep.subr.bf16.mxu0 0
    %705 = vmatpush1.bf16.msra.mxu0 0
    %706 = vmatprep.subr.bf16.mxu0 0
    %707 = vmatpush1.bf16.msra.mxu0 %v215
    %708 = vmatprep.subr.bf16.mxu0 0
    %709 = vmatpush1.bf16.msra.mxu0 %v214
    %710 = vmatprep.subr.bf16.mxu0 0
    %711 = vmatpush2.bf16.msra.mxu0 0
    %712 = vmatprep.subr.bf16.mxu0 0
    %713 = vmatpush2.bf16.msra.mxu0 0
    %714 = vmatprep.subr.bf16.mxu0 0
    %715 = vmatpush2.bf16.msra.mxu0 0
    %716 = vmatprep.subr.bf16.mxu0 0
    %717 = vmatpush2.bf16.msra.mxu0 0
    %718 = vmatprep.subr.bf16.mxu0 0
    %719 = vmatpush2.bf16.msra.mxu0 0
    %720 = vmatprep.subr.bf16.mxu0 0
    %721 = vmatpush2.bf16.msra.mxu0 0
    %722 = vmatprep.subr.bf16.mxu0 0
    %723 = vmatpush2.bf16.msra.mxu0 0
    %724 = vmatprep.subr.bf16.mxu0 0
    %725 = vmatpush2.bf16.msra.mxu0 0
    %726 = vmatprep.mubr.bf16.mxu0 0
    %727 = vmatmul.mubr.bf16.gmra.mxu0 %v692
    %v728 = vpop.f32.mrf.mxu0
    %v729 = vadd.f32 0.0, %v728
    %v730 = vpop.f32.mrf.mxu0
    %v731 = vpop.f32.mrf.mxu0
    %v732 = vpop.f32.mrf.mxu0
    %733 = vdwg.mxu0
    %v735 = vrot.slane %v729, 2
    %v737 = vadd.f32 %v205, %v735
    %v738 = vxor.u32 %v737, 2147483648
    %v739 = vmul.f32 %v738, 1.442695
    %v740 = vpow.pop %v739
    %v741 = vadd.f32 %v740, 1.0
    %v742 = vrcp.pop %v741
    %v743 = vmul.f32 1.0, %v742
    %v744 = vtanh.pop %v737
    %v746 = vrot.slane %v677, 7
    %v748 = vmul.f32 %v743, %v746
    %750 = vrot.lane.b32.xlu0 %v744, 64
    %v751 = vpop.permute.xlu0 %750
    %v753 = vmul.f32 %v743, %v751
    %755 = vrot.lane.b32.xlu0 %v753, 32
    %v756 = vpop.permute.xlu0 %755
    %v758 = vadd.f32 %v748, %v756
    %v759 = vtanh.pop %v758
    %761 = vrot.lane.b32.xlu0 %v759, 64
    %v762 = vpop.permute.xlu0 %761
    %v764 = vmul.f32 %v743, %v762
    %v765 = vpack.c.bf16 %v764, %v764
    %v767 = vrot.slane %v765, 3
    %768 = vrot.lane.b32.xlu0 %v767, 32
    %v769 = vpop.permute.xlu0 %768
    %v771 = vsel %vm218, %v769, 0
    %773 = vmatprep.subr.bf16.mxu0 0
    %774 = vmatpush1.bf16.msra.mxu0 0
    %775 = vmatprep.subr.bf16.mxu0 0
    %776 = vmatpush1.bf16.msra.mxu0 0
    %777 = vmatprep.subr.bf16.mxu0 0
    %778 = vmatpush1.bf16.msra.mxu0 0
    %779 = vmatprep.subr.bf16.mxu0 0
    %780 = vmatpush1.bf16.msra.mxu0 0
    %781 = vmatprep.subr.bf16.mxu0 0
    %782 = vmatpush1.bf16.msra.mxu0 0
    %783 = vmatprep.subr.bf16.mxu0 0
    %784 = vmatpush1.bf16.msra.mxu0 0
    %785 = vmatprep.subr.bf16.mxu0 0
    %786 = vmatpush1.bf16.msra.mxu0 %v215
    %787 = vmatprep.subr.bf16.mxu0 0
    %788 = vmatpush1.bf16.msra.mxu0 %v214
    %789 = vmatprep.subr.bf16.mxu0 0
    %790 = vmatpush2.bf16.msra.mxu0 0
    %791 = vmatprep.subr.bf16.mxu0 0
    %792 = vmatpush2.bf16.msra.mxu0 0
    %793 = vmatprep.subr.bf16.mxu0 0
    %794 = vmatpush2.bf16.msra.mxu0 0
    %795 = vmatprep.subr.bf16.mxu0 0
    %796 = vmatpush2.bf16.msra.mxu0 0
    %797 = vmatprep.subr.bf16.mxu0 0
    %798 = vmatpush2.bf16.msra.mxu0 0
    %799 = vmatprep.subr.bf16.mxu0 0
    %800 = vmatpush2.bf16.msra.mxu0 0
    %801 = vmatprep.subr.bf16.mxu0 0
    %802 = vmatpush2.bf16.msra.mxu0 0
    %803 = vmatprep.subr.bf16.mxu0 0
    %804 = vmatpush2.bf16.msra.mxu0 0
    %805 = vmatprep.mubr.bf16.mxu0 0
    %806 = vmatmul.mubr.bf16.gmra.mxu0 %v771
    %v807 = vpop.f32.mrf.mxu0
    %v808 = vadd.f32 0.0, %v807
    %v809 = vpop.f32.mrf.mxu0
    %v810 = vpop.f32.mrf.mxu0
    %v811 = vpop.f32.mrf.mxu0
    %812 = vdwg.mxu0
    %v814 = vrot.slane %v808, 1
    %v816 = vadd.f32 %v205, %v814
    %v817 = vxor.u32 %v816, 2147483648
    %v818 = vmul.f32 %v817, 1.442695
    %v819 = vpow.pop %v818
    %v820 = vadd.f32 %v819, 1.0
    %v821 = vrcp.pop %v820
    %v822 = vmul.f32 1.0, %v821
    %v823 = vtanh.pop %v816
    %v825 = vrot.slane %v758, 7
    %v827 = vmul.f32 %v822, %v825
    %829 = vrot.lane.b32.xlu0 %v823, 64
    %v830 = vpop.permute.xlu0 %829
    %v832 = vmul.f32 %v822, %v830
    %834 = vrot.lane.b32.xlu0 %v832, 32
    %v835 = vpop.permute.xlu0 %834
    %v837 = vadd.f32 %v827, %v835
    %v838 = vtanh.pop %v837
    %840 = vrot.lane.b32.xlu0 %v838, 64
    %v841 = vpop.permute.xlu0 %840
    %v843 = vmul.f32 %v822, %v841
    %vm844 = vcmask 1040384
    %v845 = vsel %vm844, %v286, %v364
    %vm846 = vcmask 1041408
    %v847 = vsel %vm846, %v845, %v444
    %vm848 = vcmask 1042432
    %v849 = vsel %vm848, %v847, %v523
    %vm850 = vcmask 1043456
    %v851 = vsel %vm850, %v849, %v604
    %vm852 = vcmask 1044480
    %v853 = vsel %vm852, %v851, %v683
    %vm854 = vcmask 1045504
    %v855 = vsel %vm854, %v853, %v764
    %vm856 = vcmask 1046528
    %v857 = vsel %vm856, %v855, %v843
    %859 = vrot.lane.b32.xlu0 %v857, 32
    %v860 = vpop.permute.xlu0 %859
    %862 = vst.msk [vmem:[#allocation2] sm:$0xff] %vm218, %v860
    %v863 = vld [vmem:[#allocation2] sm:$0xff]
    %v864 = vpack.c.bf16 %v863, %v863
    %v865 = vld [vmem:[#allocation9] sm:$0xf]
    %v866 = vld [vmem:[#allocation9 + $0x4] sm:$0xf]
    %v867 = vld [vmem:[#allocation9 + $0x8] sm:$0xf]
    %v868 = vld [vmem:[#allocation9 + $0xc] sm:$0xf]
    %v869 = vld [vmem:[#allocation9 + $0x10] sm:$0xf]
    %v870 = vld [vmem:[#allocation9 + $0x14] sm:$0xf]
    %v871 = vld [vmem:[#allocation9 + $0x18] sm:$0xf]
    %v872 = vld [vmem:[#allocation9 + $0x1c] sm:$0xf]
    %v873 = vld [vmem:[#allocation9 + $0x20] sm:$0xf]
    %v874 = vld [vmem:[#allocation9 + $0x24] sm:$0xf]
    %v875 = vld [vmem:[#allocation9 + $0x28] sm:$0xf]
    %v876 = vld [vmem:[#allocation9 + $0x2c] sm:$0xf]
    %v877 = vld [vmem:[#allocation9 + $0x30] sm:$0xf]
    %v878 = vld [vmem:[#allocation9 + $0x34] sm:$0xf]
    %v879 = vld [vmem:[#allocation9 + $0x38] sm:$0xf]
    %v880 = vld [vmem:[#allocation9 + $0x3c] sm:$0xf]
    %v881 = vld [vmem:[%s6] sm:$0x1]
    %v883 = vlaneseq
    %v884 = vshrl.u32 %v883, 7
    %v885 = vsub.s32 0, %v884
    %v886 = vrot.slane %v881, %v885
    %v904 = vunpack.c.l.b16 %v865
    %v905 = vunpack.c.l.b16 %v866
    %v906 = vunpack.c.l.b16 %v867
    %v907 = vunpack.c.l.b16 %v868
    %v908 = vunpack.c.l.b16 %v869
    %v909 = vunpack.c.l.b16 %v870
    %v910 = vunpack.c.l.b16 %v871
    %v911 = vunpack.c.l.b16 %v872
    %v912 = vunpack.c.l.b16 %v873
    %v913 = vunpack.c.l.b16 %v874
    %v914 = vunpack.c.l.b16 %v875
    %v915 = vunpack.c.l.b16 %v876
    %v916 = vunpack.c.l.b16 %v877
    %v917 = vunpack.c.l.b16 %v878
    %v918 = vunpack.c.l.b16 %v879
    %v919 = vunpack.c.l.b16 %v880
    %v920 = vpack.c.b16 %v905, %v904
    %v921 = vpack.c.b16 %v907, %v906
    %v922 = vpack.c.b16 %v909, %v908
    %v923 = vpack.c.b16 %v911, %v910
    %v924 = vpack.c.b16 %v913, %v912
    %v925 = vpack.c.b16 %v915, %v914
    %v926 = vpack.c.b16 %v917, %v916
    %v927 = vpack.c.b16 %v919, %v918
    %936 = vmatprep.subr.bf16.mxu0 0
    %937 = vmatpush1.bf16.msra.mxu0 %v927
    %938 = vmatprep.subr.bf16.mxu0 0
    %939 = vmatpush1.bf16.msra.mxu0 %v926
    %940 = vmatprep.subr.bf16.mxu0 0
    %941 = vmatpush1.bf16.msra.mxu0 %v925
    %942 = vmatprep.subr.bf16.mxu0 0
    %943 = vmatpush1.bf16.msra.mxu0 %v924
    %944 = vmatprep.subr.bf16.mxu0 0
    %945 = vmatpush1.bf16.msra.mxu0 %v923
    %946 = vmatprep.subr.bf16.mxu0 0
    %947 = vmatpush1.bf16.msra.mxu0 %v922
    %948 = vmatprep.subr.bf16.mxu0 0
    %949 = vmatpush1.bf16.msra.mxu0 %v921
    %950 = vmatprep.subr.bf16.mxu0 0
    %951 = vmatpush1.bf16.msra.mxu0 %v920
    %952 = vmatprep.subr.bf16.mxu0 0
    %953 = vmatpush2.bf16.msra.mxu0 0
    %954 = vmatprep.subr.bf16.mxu0 0
    %955 = vmatpush2.bf16.msra.mxu0 0
    %956 = vmatprep.subr.bf16.mxu0 0
    %957 = vmatpush2.bf16.msra.mxu0 0
    %958 = vmatprep.subr.bf16.mxu0 0
    %959 = vmatpush2.bf16.msra.mxu0 0
    %960 = vmatprep.subr.bf16.mxu0 0
    %961 = vmatpush2.bf16.msra.mxu0 0
    %962 = vmatprep.subr.bf16.mxu0 0
    %963 = vmatpush2.bf16.msra.mxu0 0
    %964 = vmatprep.subr.bf16.mxu0 0
    %965 = vmatpush2.bf16.msra.mxu0 0
    %966 = vmatprep.subr.bf16.mxu0 0
    %967 = vmatpush2.bf16.msra.mxu0 0
    %968 = vmatprep.mubr.bf16.mxu0 0
    %969 = vmatmul.mubr.bf16.gmra.mxu0 %v864
    %v970 = vpop.f32.mrf.mxu0
    %v971 = vadd.f32 %v886, %v970
    %v972 = vpop.f32.mrf.mxu0
    %v973 = vpop.f32.mrf.mxu0
    %v974 = vpop.f32.mrf.mxu0
    %975 = vdwg.mxu0
    %976 = vst [vmem:[#allocation3] sm:$0xff] %v971
    %v977 = vld [vmem:[%s5] sm:$0xf]
    %v978 = vld [vmem:[%s5 + $0x4] sm:$0xf]
    %v979 = vld [vmem:[%s5 + $0x8] sm:$0xf]
    %v980 = vld [vmem:[%s5 + $0xc] sm:$0xf]
    %v981 = vld [vmem:[#allocation3] sm:$0xff]
    %v986 = vunpack.c.l.b16 %v977
    %v987 = vunpack.c.l.b16 %v978
    %v988 = vunpack.c.l.b16 %v979
    %v989 = vunpack.c.l.b16 %v980
    %v990 = vpack.c.b16 %v987, %v986
    %v991 = vpack.c.b16 %v989, %v988
    %994 = vmatprep.subr.bf16.mxu0 0
    %995 = vmatpush1.bf16.msra.mxu0 0
    %996 = vmatprep.subr.bf16.mxu0 0
    %997 = vmatpush1.bf16.msra.mxu0 0
    %998 = vmatprep.subr.bf16.mxu0 0
    %999 = vmatpush1.bf16.msra.mxu0 0
    %1000 = vmatprep.subr.bf16.mxu0 0
    %1001 = vmatpush1.bf16.msra.mxu0 0
    %1002 = vmatprep.subr.bf16.mxu0 0
    %1003 = vmatpush1.bf16.msra.mxu0 0
    %1004 = vmatprep.subr.bf16.mxu0 0
    %1005 = vmatpush1.bf16.msra.mxu0 0
    %1006 = vmatprep.subr.bf16.mxu0 0
    %1007 = vmatpush1.bf16.msra.mxu0 %v991
    %1008 = vmatprep.subr.bf16.mxu0 0
    %1009 = vmatpush1.bf16.msra.mxu0 %v990
    %1010 = vmatprep.subr.bf16.mxu0 0
    %1011 = vmatpush2.bf16.msra.mxu0 0
    %1012 = vmatprep.subr.bf16.mxu0 0
    %1013 = vmatpush2.bf16.msra.mxu0 0
    %1014 = vmatprep.subr.bf16.mxu0 0
    %1015 = vmatpush2.bf16.msra.mxu0 0
    %1016 = vmatprep.subr.bf16.mxu0 0
    %1017 = vmatpush2.bf16.msra.mxu0 0
    %1018 = vmatprep.subr.bf16.mxu0 0
    %1019 = vmatpush2.bf16.msra.mxu0 0
    %1020 = vmatprep.subr.bf16.mxu0 0
    %1021 = vmatpush2.bf16.msra.mxu0 0
    %1022 = vmatprep.subr.bf16.mxu0 0
    %1023 = vmatpush2.bf16.msra.mxu0 0
    %1024 = vmatprep.subr.bf16.mxu0 0
    %1025 = vmatpush2.bf16.msra.mxu0 0
    %1026 = vmatprep.mubr.bf16.mxu0 0
    %1027 = vmatmul.mubr.bf16.gmra.mxu0 %v220
    %v1028 = vpop.f32.mrf.mxu0
    %v1029 = vadd.f32 0.0, %v1028
    %v1030 = vpop.f32.mrf.mxu0
    %v1031 = vpop.f32.mrf.mxu0
    %v1032 = vpop.f32.mrf.mxu0
    %1033 = vdwg.mxu0
    %v1034 = vadd.f32 %v981, %v1029
    %v1035 = vxor.u32 %v1034, 2147483648
    %v1036 = vmul.f32 %v1035, 1.442695
    %v1037 = vpow.pop %v1036
    %v1038 = vadd.f32 %v1037, 1.0
    %v1039 = vrcp.pop %v1038
    %v1040 = vmul.f32 1.0, %v1039
    %v1041 = vtanh.pop %v1034
    %v1042 = vmul.f32 %v1040, 0.0
    %1044 = vrot.lane.b32.xlu0 %v1041, 64
    %v1045 = vpop.permute.xlu0 %1044
    %v1047 = vmul.f32 %v1040, %v1045
    %1049 = vrot.lane.b32.xlu0 %v1047, 32
    %v1050 = vpop.permute.xlu0 %1049
    %v1052 = vadd.f32 %v1042, %v1050
    %v1053 = vtanh.pop %v1052
    %1055 = vrot.lane.b32.xlu0 %v1053, 64
    %v1056 = vpop.permute.xlu0 %1055
    %v1058 = vmul.f32 %v1040, %v1056
    %v1059 = vpack.c.bf16 %v1058, %v1058
    %1061 = vrot.lane.b32.xlu0 %v1059, 32
    %v1062 = vpop.permute.xlu0 %1061
    %v1064 = vsel %vm218, %v1062, 0
    %1066 = vmatprep.subr.bf16.mxu0 0
    %1067 = vmatpush1.bf16.msra.mxu0 0
    %1068 = vmatprep.subr.bf16.mxu0 0
    %1069 = vmatpush1.bf16.msra.mxu0 0
    %1070 = vmatprep.subr.bf16.mxu0 0
    %1071 = vmatpush1.bf16.msra.mxu0 0
    %1072 = vmatprep.subr.bf16.mxu0 0
    %1073 = vmatpush1.bf16.msra.mxu0 0
    %1074 = vmatprep.subr.bf16.mxu0 0
    %1075 = vmatpush1.bf16.msra.mxu0 0
    %1076 = vmatprep.subr.bf16.mxu0 0
    %1077 = vmatpush1.bf16.msra.mxu0 0
    %1078 = vmatprep.subr.bf16.mxu0 0
    %1079 = vmatpush1.bf16.msra.mxu0 %v991
    %1080 = vmatprep.subr.bf16.mxu0 0
    %1081 = vmatpush1.bf16.msra.mxu0 %v990
    %1082 = vmatprep.subr.bf16.mxu0 0
    %1083 = vmatpush2.bf16.msra.mxu0 0
    %1084 = vmatprep.subr.bf16.mxu0 0
    %1085 = vmatpush2.bf16.msra.mxu0 0
    %1086 = vmatprep.subr.bf16.mxu0 0
    %1087 = vmatpush2.bf16.msra.mxu0 0
    %1088 = vmatprep.subr.bf16.mxu0 0
    %1089 = vmatpush2.bf16.msra.mxu0 0
    %1090 = vmatprep.subr.bf16.mxu0 0
    %1091 = vmatpush2.bf16.msra.mxu0 0
    %1092 = vmatprep.subr.bf16.mxu0 0
    %1093 = vmatpush2.bf16.msra.mxu0 0
    %1094 = vmatprep.subr.bf16.mxu0 0
    %1095 = vmatpush2.bf16.msra.mxu0 0
    %1096 = vmatprep.subr.bf16.mxu0 0
    %1097 = vmatpush2.bf16.msra.mxu0 0
    %1098 = vmatprep.mubr.bf16.mxu0 0
    %1099 = vmatmul.mubr.bf16.gmra.mxu0 %v1064
    %v1100 = vpop.f32.mrf.mxu0
    %v1101 = vadd.f32 0.0, %v1100
    %v1102 = vpop.f32.mrf.mxu0
    %v1103 = vpop.f32.mrf.mxu0
    %v1104 = vpop.f32.mrf.mxu0
    %1105 = vdwg.mxu0
    %v1107 = vrot.slane %v1101, 7
    %v1109 = vadd.f32 %v981, %v1107
    %v1110 = vxor.u32 %v1109, 2147483648
    %v1111 = vmul.f32 %v1110, 1.442695
    %v1112 = vpow.pop %v1111
    %v1113 = vadd.f32 %v1112, 1.0
    %v1114 = vrcp.pop %v1113
    %v1115 = vmul.f32 1.0, %v1114
    %v1116 = vtanh.pop %v1109
    %v1118 = vrot.slane %v1052, 7
    %v1120 = vmul.f32 %v1115, %v1118
    %1122 = vrot.lane.b32.xlu0 %v1116, 64
    %v1123 = vpop.permute.xlu0 %1122
    %v1125 = vmul.f32 %v1115, %v1123
    %1127 = vrot.lane.b32.xlu0 %v1125, 32
    %v1128 = vpop.permute.xlu0 %1127
    %v1130 = vadd.f32 %v1120, %v1128
    %v1131 = vtanh.pop %v1130
    %1133 = vrot.lane.b32.xlu0 %v1131, 64
    %v1134 = vpop.permute.xlu0 %1133
    %v1136 = vmul.f32 %v1115, %v1134
    %v1137 = vpack.c.bf16 %v1136, %v1136
    %v1139 = vshrl.u32 %v1137, 16
    %1141 = vrot.lane.b32.xlu0 %v1139, 32
    %v1142 = vpop.permute.xlu0 %1141
    %v1144 = vsel %vm218, %v1142, 0
    %1146 = vmatprep.subr.bf16.mxu0 0
    %1147 = vmatpush1.bf16.msra.mxu0 0
    %1148 = vmatprep.subr.bf16.mxu0 0
    %1149 = vmatpush1.bf16.msra.mxu0 0
    %1150 = vmatprep.subr.bf16.mxu0 0
    %1151 = vmatpush1.bf16.msra.mxu0 0
    %1152 = vmatprep.subr.bf16.mxu0 0
    %1153 = vmatpush1.bf16.msra.mxu0 0
    %1154 = vmatprep.subr.bf16.mxu0 0
    %1155 = vmatpush1.bf16.msra.mxu0 0
    %1156 = vmatprep.subr.bf16.mxu0 0
    %1157 = vmatpush1.bf16.msra.mxu0 0
    %1158 = vmatprep.subr.bf16.mxu0 0
    %1159 = vmatpush1.bf16.msra.mxu0 %v991
    %1160 = vmatprep.subr.bf16.mxu0 0
    %1161 = vmatpush1.bf16.msra.mxu0 %v990
    %1162 = vmatprep.subr.bf16.mxu0 0
    %1163 = vmatpush2.bf16.msra.mxu0 0
    %1164 = vmatprep.subr.bf16.mxu0 0
    %1165 = vmatpush2.bf16.msra.mxu0 0
    %1166 = vmatprep.subr.bf16.mxu0 0
    %1167 = vmatpush2.bf16.msra.mxu0 0
    %1168 = vmatprep.subr.bf16.mxu0 0
    %1169 = vmatpush2.bf16.msra.mxu0 0
    %1170 = vmatprep.subr.bf16.mxu0 0
    %1171 = vmatpush2.bf16.msra.mxu0 0
    %1172 = vmatprep.subr.bf16.mxu0 0
    %1173 = vmatpush2.bf16.msra.mxu0 0
    %1174 = vmatprep.subr.bf16.mxu0 0
    %1175 = vmatpush2.bf16.msra.mxu0 0
    %1176 = vmatprep.subr.bf16.mxu0 0
    %1177 = vmatpush2.bf16.msra.mxu0 0
    %1178 = vmatprep.mubr.bf16.mxu0 0
    %1179 = vmatmul.mubr.bf16.gmra.mxu0 %v1144
    %v1180 = vpop.f32.mrf.mxu0
    %v1181 = vadd.f32 0.0, %v1180
    %v1182 = vpop.f32.mrf.mxu0
    %v1183 = vpop.f32.mrf.mxu0
    %v1184 = vpop.f32.mrf.mxu0
    %1185 = vdwg.mxu0
    %v1187 = vrot.slane %v1181, 6
    %v1189 = vadd.f32 %v981, %v1187
    %v1190 = vxor.u32 %v1189, 2147483648
    %v1191 = vmul.f32 %v1190, 1.442695
    %v1192 = vpow.pop %v1191
    %v1193 = vadd.f32 %v1192, 1.0
    %v1194 = vrcp.pop %v1193
    %v1195 = vmul.f32 1.0, %v1194
    %v1196 = vtanh.pop %v1189
    %v1198 = vrot.slane %v1130, 7
    %v1200 = vmul.f32 %v1195, %v1198
    %1202 = vrot.lane.b32.xlu0 %v1196, 64
    %v1203 = vpop.permute.xlu0 %1202
    %v1205 = vmul.f32 %v1195, %v1203
    %1207 = vrot.lane.b32.xlu0 %v1205, 32
    %v1208 = vpop.permute.xlu0 %1207
    %v1210 = vadd.f32 %v1200, %v1208
    %v1211 = vtanh.pop %v1210
    %1213 = vrot.lane.b32.xlu0 %v1211, 64
    %v1214 = vpop.permute.xlu0 %1213
    %v1216 = vmul.f32 %v1195, %v1214
    %v1217 = vpack.c.bf16 %v1216, %v1216
    %v1219 = vrot.slane %v1217, 1
    %1220 = vrot.lane.b32.xlu0 %v1219, 32
    %v1221 = vpop.permute.xlu0 %1220
    %v1223 = vsel %vm218, %v1221, 0
    %1225 = vmatprep.subr.bf16.mxu0 0
    %1226 = vmatpush1.bf16.msra.mxu0 0
    %1227 = vmatprep.subr.bf16.mxu0 0
    %1228 = vmatpush1.bf16.msra.mxu0 0
    %1229 = vmatprep.subr.bf16.mxu0 0
    %1230 = vmatpush1.bf16.msra.mxu0 0
    %1231 = vmatprep.subr.bf16.mxu0 0
    %1232 = vmatpush1.bf16.msra.mxu0 0
    %1233 = vmatprep.subr.bf16.mxu0 0
    %1234 = vmatpush1.bf16.msra.mxu0 0
    %1235 = vmatprep.subr.bf16.mxu0 0
    %1236 = vmatpush1.bf16.msra.mxu0 0
    %1237 = vmatprep.subr.bf16.mxu0 0
    %1238 = vmatpush1.bf16.msra.mxu0 %v991
    %1239 = vmatprep.subr.bf16.mxu0 0
    %1240 = vmatpush1.bf16.msra.mxu0 %v990
    %1241 = vmatprep.subr.bf16.mxu0 0
    %1242 = vmatpush2.bf16.msra.mxu0 0
    %1243 = vmatprep.subr.bf16.mxu0 0
    %1244 = vmatpush2.bf16.msra.mxu0 0
    %1245 = vmatprep.subr.bf16.mxu0 0
    %1246 = vmatpush2.bf16.msra.mxu0 0
    %1247 = vmatprep.subr.bf16.mxu0 0
    %1248 = vmatpush2.bf16.msra.mxu0 0
    %1249 = vmatprep.subr.bf16.mxu0 0
    %1250 = vmatpush2.bf16.msra.mxu0 0
    %1251 = vmatprep.subr.bf16.mxu0 0
    %1252 = vmatpush2.bf16.msra.mxu0 0
    %1253 = vmatprep.subr.bf16.mxu0 0
    %1254 = vmatpush2.bf16.msra.mxu0 0
    %1255 = vmatprep.subr.bf16.mxu0 0
    %1256 = vmatpush2.bf16.msra.mxu0 0
    %1257 = vmatprep.mubr.bf16.mxu0 0
    %1258 = vmatmul.mubr.bf16.gmra.mxu0 %v1223
    %v1259 = vpop.f32.mrf.mxu0
    %v1260 = vadd.f32 0.0, %v1259
    %v1261 = vpop.f32.mrf.mxu0
    %v1262 = vpop.f32.mrf.mxu0
    %v1263 = vpop.f32.mrf.mxu0
    %1264 = vdwg.mxu0
    %v1266 = vrot.slane %v1260, 5
    %v1268 = vadd.f32 %v981, %v1266
    %v1269 = vxor.u32 %v1268, 2147483648
    %v1270 = vmul.f32 %v1269, 1.442695
    %v1271 = vpow.pop %v1270
    %v1272 = vadd.f32 %v1271, 1.0
    %v1273 = vrcp.pop %v1272
    %v1274 = vmul.f32 1.0, %v1273
    %v1275 = vtanh.pop %v1268
    %v1277 = vrot.slane %v1210, 7
    %v1279 = vmul.f32 %v1274, %v1277
    %1281 = vrot.lane.b32.xlu0 %v1275, 64
    %v1282 = vpop.permute.xlu0 %1281
    %v1284 = vmul.f32 %v1274, %v1282
    %1286 = vrot.lane.b32.xlu0 %v1284, 32
    %v1287 = vpop.permute.xlu0 %1286
    %v1289 = vadd.f32 %v1279, %v1287
    %v1290 = vtanh.pop %v1289
    %1292 = vrot.lane.b32.xlu0 %v1290, 64
    %v1293 = vpop.permute.xlu0 %1292
    %v1295 = vmul.f32 %v1274, %v1293
    %v1296 = vpack.c.bf16 %v1295, %v1295
    %v1298 = vshrl.u32 %v1296, 16
    %v1300 = vrot.slane %v1298, 1
    %1301 = vrot.lane.b32.xlu0 %v1300, 32
    %v1302 = vpop.permute.xlu0 %1301
    %v1304 = vsel %vm218, %v1302, 0
    %1306 = vmatprep.subr.bf16.mxu0 0
    %1307 = vmatpush1.bf16.msra.mxu0 0
    %1308 = vmatprep.subr.bf16.mxu0 0
    %1309 = vmatpush1.bf16.msra.mxu0 0
    %1310 = vmatprep.subr.bf16.mxu0 0
    %1311 = vmatpush1.bf16.msra.mxu0 0
    %1312 = vmatprep.subr.bf16.mxu0 0
    %1313 = vmatpush1.bf16.msra.mxu0 0
    %1314 = vmatprep.subr.bf16.mxu0 0
    %1315 = vmatpush1.bf16.msra.mxu0 0
    %1316 = vmatprep.subr.bf16.mxu0 0
    %1317 = vmatpush1.bf16.msra.mxu0 0
    %1318 = vmatprep.subr.bf16.mxu0 0
    %1319 = vmatpush1.bf16.msra.mxu0 %v991
    %1320 = vmatprep.subr.bf16.mxu0 0
    %1321 = vmatpush1.bf16.msra.mxu0 %v990
    %1322 = vmatprep.subr.bf16.mxu0 0
    %1323 = vmatpush2.bf16.msra.mxu0 0
    %1324 = vmatprep.subr.bf16.mxu0 0
    %1325 = vmatpush2.bf16.msra.mxu0 0
    %1326 = vmatprep.subr.bf16.mxu0 0
    %1327 = vmatpush2.bf16.msra.mxu0 0
    %1328 = vmatprep.subr.bf16.mxu0 0
    %1329 = vmatpush2.bf16.msra.mxu0 0
    %1330 = vmatprep.subr.bf16.mxu0 0
    %1331 = vmatpush2.bf16.msra.mxu0 0
    %1332 = vmatprep.subr.bf16.mxu0 0
    %1333 = vmatpush2.bf16.msra.mxu0 0
    %1334 = vmatprep.subr.bf16.mxu0 0
    %1335 = vmatpush2.bf16.msra.mxu0 0
    %1336 = vmatprep.subr.bf16.mxu0 0
    %1337 = vmatpush2.bf16.msra.mxu0 0
    %1338 = vmatprep.mubr.bf16.mxu0 0
    %1339 = vmatmul.mubr.bf16.gmra.mxu0 %v1304
    %v1340 = vpop.f32.mrf.mxu0
    %v1341 = vadd.f32 0.0, %v1340
    %v1342 = vpop.f32.mrf.mxu0
    %v1343 = vpop.f32.mrf.mxu0
    %v1344 = vpop.f32.mrf.mxu0
    %1345 = vdwg.mxu0
    %v1347 = vrot.slane %v1341, 4
    %v1349 = vadd.f32 %v981, %v1347
    %v1350 = vxor.u32 %v1349, 2147483648
    %v1351 = vmul.f32 %v1350, 1.442695
    %v1352 = vpow.pop %v1351
    %v1353 = vadd.f32 %v1352, 1.0
    %v1354 = vrcp.pop %v1353
    %v1355 = vmul.f32 1.0, %v1354
    %v1356 = vtanh.pop %v1349
    %v1358 = vrot.slane %v1289, 7
    %v1360 = vmul.f32 %v1355, %v1358
    %1362 = vrot.lane.b32.xlu0 %v1356, 64
    %v1363 = vpop.permute.xlu0 %1362
    %v1365 = vmul.f32 %v1355, %v1363
    %1367 = vrot.lane.b32.xlu0 %v1365, 32
    %v1368 = vpop.permute.xlu0 %1367
    %v1370 = vadd.f32 %v1360, %v1368
    %v1371 = vtanh.pop %v1370
    %1373 = vrot.lane.b32.xlu0 %v1371, 64
    %v1374 = vpop.permute.xlu0 %1373
    %v1376 = vmul.f32 %v1355, %v1374
    %v1377 = vpack.c.bf16 %v1376, %v1376
    %v1379 = vrot.slane %v1377, 2
    %1380 = vrot.lane.b32.xlu0 %v1379, 32
    %v1381 = vpop.permute.xlu0 %1380
    %v1383 = vsel %vm218, %v1381, 0
    %1385 = vmatprep.subr.bf16.mxu0 0
    %1386 = vmatpush1.bf16.msra.mxu0 0
    %1387 = vmatprep.subr.bf16.mxu0 0
    %1388 = vmatpush1.bf16.msra.mxu0 0
    %1389 = vmatprep.subr.bf16.mxu0 0
    %1390 = vmatpush1.bf16.msra.mxu0 0
    %1391 = vmatprep.subr.bf16.mxu0 0
    %1392 = vmatpush1.bf16.msra.mxu0 0
    %1393 = vmatprep.subr.bf16.mxu0 0
    %1394 = vmatpush1.bf16.msra.mxu0 0
    %1395 = vmatprep.subr.bf16.mxu0 0
    %1396 = vmatpush1.bf16.msra.mxu0 0
    %1397 = vmatprep.subr.bf16.mxu0 0
    %1398 = vmatpush1.bf16.msra.mxu0 %v991
    %1399 = vmatprep.subr.bf16.mxu0 0
    %1400 = vmatpush1.bf16.msra.mxu0 %v990
    %1401 = vmatprep.subr.bf16.mxu0 0
    %1402 = vmatpush2.bf16.msra.mxu0 0
    %1403 = vmatprep.subr.bf16.mxu0 0
    %1404 = vmatpush2.bf16.msra.mxu0 0
    %1405 = vmatprep.subr.bf16.mxu0 0
    %1406 = vmatpush2.bf16.msra.mxu0 0
    %1407 = vmatprep.subr.bf16.mxu0 0
    %1408 = vmatpush2.bf16.msra.mxu0 0
    %1409 = vmatprep.subr.bf16.mxu0 0
    %1410 = vmatpush2.bf16.msra.mxu0 0
    %1411 = vmatprep.subr.bf16.mxu0 0
    %1412 = vmatpush2.bf16.msra.mxu0 0
    %1413 = vmatprep.subr.bf16.mxu0 0
    %1414 = vmatpush2.bf16.msra.mxu0 0
    %1415 = vmatprep.subr.bf16.mxu0 0
    %1416 = vmatpush2.bf16.msra.mxu0 0
    %1417 = vmatprep.mubr.bf16.mxu0 0
    %1418 = vmatmul.mubr.bf16.gmra.mxu0 %v1383
    %v1419 = vpop.f32.mrf.mxu0
    %v1420 = vadd.f32 0.0, %v1419
    %v1421 = vpop.f32.mrf.mxu0
    %v1422 = vpop.f32.mrf.mxu0
    %v1423 = vpop.f32.mrf.mxu0
    %1424 = vdwg.mxu0
    %v1426 = vrot.slane %v1420, 3
    %v1428 = vadd.f32 %v981, %v1426
    %v1429 = vxor.u32 %v1428, 2147483648
    %v1430 = vmul.f32 %v1429, 1.442695
    %v1431 = vpow.pop %v1430
    %v1432 = vadd.f32 %v1431, 1.0
    %v1433 = vrcp.pop %v1432
    %v1434 = vmul.f32 1.0, %v1433
    %v1435 = vtanh.pop %v1428
    %v1437 = vrot.slane %v1370, 7
    %v1439 = vmul.f32 %v1434, %v1437
    %1441 = vrot.lane.b32.xlu0 %v1435, 64
    %v1442 = vpop.permute.xlu0 %1441
    %v1444 = vmul.f32 %v1434, %v1442
    %1446 = vrot.lane.b32.xlu0 %v1444, 32
    %v1447 = vpop.permute.xlu0 %1446
    %v1449 = vadd.f32 %v1439, %v1447
    %v1450 = vtanh.pop %v1449
    %1452 = vrot.lane.b32.xlu0 %v1450, 64
    %v1453 = vpop.permute.xlu0 %1452
    %v1455 = vmul.f32 %v1434, %v1453
    %v1456 = vpack.c.bf16 %v1455, %v1455
    %v1458 = vshrl.u32 %v1456, 16
    %v1460 = vrot.slane %v1458, 2
    %1461 = vrot.lane.b32.xlu0 %v1460, 32
    %v1462 = vpop.permute.xlu0 %1461
    %v1464 = vsel %vm218, %v1462, 0
    %1466 = vmatprep.subr.bf16.mxu0 0
    %1467 = vmatpush1.bf16.msra.mxu0 0
    %1468 = vmatprep.subr.bf16.mxu0 0
    %1469 = vmatpush1.bf16.msra.mxu0 0
    %1470 = vmatprep.subr.bf16.mxu0 0
    %1471 = vmatpush1.bf16.msra.mxu0 0
    %1472 = vmatprep.subr.bf16.mxu0 0
    %1473 = vmatpush1.bf16.msra.mxu0 0
    %1474 = vmatprep.subr.bf16.mxu0 0
    %1475 = vmatpush1.bf16.msra.mxu0 0
    %1476 = vmatprep.subr.bf16.mxu0 0
    %1477 = vmatpush1.bf16.msra.mxu0 0
    %1478 = vmatprep.subr.bf16.mxu0 0
    %1479 = vmatpush1.bf16.msra.mxu0 %v991
    %1480 = vmatprep.subr.bf16.mxu0 0
    %1481 = vmatpush1.bf16.msra.mxu0 %v990
    %1482 = vmatprep.subr.bf16.mxu0 0
    %1483 = vmatpush2.bf16.msra.mxu0 0
    %1484 = vmatprep.subr.bf16.mxu0 0
    %1485 = vmatpush2.bf16.msra.mxu0 0
    %1486 = vmatprep.subr.bf16.mxu0 0
    %1487 = vmatpush2.bf16.msra.mxu0 0
    %1488 = vmatprep.subr.bf16.mxu0 0
    %1489 = vmatpush2.bf16.msra.mxu0 0
    %1490 = vmatprep.subr.bf16.mxu0 0
    %1491 = vmatpush2.bf16.msra.mxu0 0
    %1492 = vmatprep.subr.bf16.mxu0 0
    %1493 = vmatpush2.bf16.msra.mxu0 0
    %1494 = vmatprep.subr.bf16.mxu0 0
    %1495 = vmatpush2.bf16.msra.mxu0 0
    %1496 = vmatprep.subr.bf16.mxu0 0
    %1497 = vmatpush2.bf16.msra.mxu0 0
    %1498 = vmatprep.mubr.bf16.mxu0 0
    %1499 = vmatmul.mubr.bf16.gmra.mxu0 %v1464
    %v1500 = vpop.f32.mrf.mxu0
    %v1501 = vadd.f32 0.0, %v1500
    %v1502 = vpop.f32.mrf.mxu0
    %v1503 = vpop.f32.mrf.mxu0
    %v1504 = vpop.f32.mrf.mxu0
    %1505 = vdwg.mxu0
    %v1507 = vrot.slane %v1501, 2
    %v1509 = vadd.f32 %v981, %v1507
    %v1510 = vxor.u32 %v1509, 2147483648
    %v1511 = vmul.f32 %v1510, 1.442695
    %v1512 = vpow.pop %v1511
    %v1513 = vadd.f32 %v1512, 1.0
    %v1514 = vrcp.pop %v1513
    %v1515 = vmul.f32 1.0, %v1514
    %v1516 = vtanh.pop %v1509
    %v1518 = vrot.slane %v1449, 7
    %v1520 = vmul.f32 %v1515, %v1518
    %1522 = vrot.lane.b32.xlu0 %v1516, 64
    %v1523 = vpop.permute.xlu0 %1522
    %v1525 = vmul.f32 %v1515, %v1523
    %1527 = vrot.lane.b32.xlu0 %v1525, 32
    %v1528 = vpop.permute.xlu0 %1527
    %v1530 = vadd.f32 %v1520, %v1528
    %v1531 = vtanh.pop %v1530
    %1533 = vrot.lane.b32.xlu0 %v1531, 64
    %v1534 = vpop.permute.xlu0 %1533
    %v1536 = vmul.f32 %v1515, %v1534
    %v1537 = vpack.c.bf16 %v1536, %v1536
    %v1539 = vrot.slane %v1537, 3
    %1540 = vrot.lane.b32.xlu0 %v1539, 32
    %v1541 = vpop.permute.xlu0 %1540
    %v1543 = vsel %vm218, %v1541, 0
    %1545 = vmatprep.subr.bf16.mxu0 0
    %1546 = vmatpush1.bf16.msra.mxu0 0
    %1547 = vmatprep.subr.bf16.mxu0 0
    %1548 = vmatpush1.bf16.msra.mxu0 0
    %1549 = vmatprep.subr.bf16.mxu0 0
    %1550 = vmatpush1.bf16.msra.mxu0 0
    %1551 = vmatprep.subr.bf16.mxu0 0
    %1552 = vmatpush1.bf16.msra.mxu0 0
    %1553 = vmatprep.subr.bf16.mxu0 0
    %1554 = vmatpush1.bf16.msra.mxu0 0
    %1555 = vmatprep.subr.bf16.mxu0 0
    %1556 = vmatpush1.bf16.msra.mxu0 0
    %1557 = vmatprep.subr.bf16.mxu0 0
    %1558 = vmatpush1.bf16.msra.mxu0 %v991
    %1559 = vmatprep.subr.bf16.mxu0 0
    %1560 = vmatpush1.bf16.msra.mxu0 %v990
    %1561 = vmatprep.subr.bf16.mxu0 0
    %1562 = vmatpush2.bf16.msra.mxu0 0
    %1563 = vmatprep.subr.bf16.mxu0 0
    %1564 = vmatpush2.bf16.msra.mxu0 0
    %1565 = vmatprep.subr.bf16.mxu0 0
    %1566 = vmatpush2.bf16.msra.mxu0 0
    %1567 = vmatprep.subr.bf16.mxu0 0
    %1568 = vmatpush2.bf16.msra.mxu0 0
    %1569 = vmatprep.subr.bf16.mxu0 0
    %1570 = vmatpush2.bf16.msra.mxu0 0
    %1571 = vmatprep.subr.bf16.mxu0 0
    %1572 = vmatpush2.bf16.msra.mxu0 0
    %1573 = vmatprep.subr.bf16.mxu0 0
    %1574 = vmatpush2.bf16.msra.mxu0 0
    %1575 = vmatprep.subr.bf16.mxu0 0
    %1576 = vmatpush2.bf16.msra.mxu0 0
    %1577 = vmatprep.mubr.bf16.mxu0 0
    %1578 = vmatmul.mubr.bf16.gmra.mxu0 %v1543
    %v1579 = vpop.f32.mrf.mxu0
    %v1580 = vadd.f32 0.0, %v1579
    %v1581 = vpop.f32.mrf.mxu0
    %v1582 = vpop.f32.mrf.mxu0
    %v1583 = vpop.f32.mrf.mxu0
    %1584 = vdwg.mxu0
    %v1586 = vrot.slane %v1580, 1
    %v1588 = vadd.f32 %v981, %v1586
    %v1589 = vxor.u32 %v1588, 2147483648
    %v1590 = vmul.f32 %v1589, 1.442695
    %v1591 = vpow.pop %v1590
    %v1592 = vadd.f32 %v1591, 1.0
    %v1593 = vrcp.pop %v1592
    %v1594 = vmul.f32 1.0, %v1593
    %v1595 = vtanh.pop %v1588
    %v1597 = vrot.slane %v1530, 7
    %v1599 = vmul.f32 %v1594, %v1597
    %1601 = vrot.lane.b32.xlu0 %v1595, 64
    %v1602 = vpop.permute.xlu0 %1601
    %v1604 = vmul.f32 %v1594, %v1602
    %1606 = vrot.lane.b32.xlu0 %v1604, 32
    %v1607 = vpop.permute.xlu0 %1606
    %v1609 = vadd.f32 %v1599, %v1607
    %v1610 = vtanh.pop %v1609
    %1612 = vrot.lane.b32.xlu0 %v1610, 64
    %v1613 = vpop.permute.xlu0 %1612
    %v1615 = vmul.f32 %v1594, %v1613
    %v1616 = vsel %vm844, %v1058, %v1136
    %v1617 = vsel %vm846, %v1616, %v1216
    %v1618 = vsel %vm848, %v1617, %v1295
    %v1619 = vsel %vm850, %v1618, %v1376
    %v1620 = vsel %vm852, %v1619, %v1455
    %v1621 = vsel %vm854, %v1620, %v1536
    %v1622 = vsel %vm856, %v1621, %v1615
    %1624 = vrot.lane.b32.xlu0 %v1622, 32
    %v1625 = vpop.permute.xlu0 %1624
    %1627 = vst.msk [vmem:[#allocation2] sm:$0xff] %vm218, %v1625
    %v1628 = vld [vmem:[#allocation2] sm:$0xff]
    %v1629 = vpack.c.bf16 %v1628, %v1628
    %v1630 = vld [vmem:[#allocation10] sm:$0xf]
    %v1631 = vld [vmem:[#allocation10 + $0x4] sm:$0xf]
    %v1632 = vld [vmem:[#allocation10 + $0x8] sm:$0xf]
    %v1633 = vld [vmem:[#allocation10 + $0xc] sm:$0xf]
    %v1634 = vld [vmem:[#allocation10 + $0x10] sm:$0xf]
    %v1635 = vld [vmem:[#allocation10 + $0x14] sm:$0xf]
    %v1636 = vld [vmem:[#allocation10 + $0x18] sm:$0xf]
    %v1637 = vld [vmem:[#allocation10 + $0x1c] sm:$0xf]
    %v1638 = vld [vmem:[#allocation10 + $0x20] sm:$0xf]
    %v1639 = vld [vmem:[#allocation10 + $0x24] sm:$0xf]
    %v1640 = vld [vmem:[#allocation10 + $0x28] sm:$0xf]
    %v1641 = vld [vmem:[#allocation10 + $0x2c] sm:$0xf]
    %v1642 = vld [vmem:[#allocation10 + $0x30] sm:$0xf]
    %v1643 = vld [vmem:[#allocation10 + $0x34] sm:$0xf]
    %v1644 = vld [vmem:[#allocation10 + $0x38] sm:$0xf]
    %v1645 = vld [vmem:[#allocation10 + $0x3c] sm:$0xf]
    %v1646 = vld [vmem:[%s8] sm:$0x1]
    %v1648 = vlaneseq
    %v1649 = vshrl.u32 %v1648, 7
    %v1650 = vsub.s32 0, %v1649
    %v1651 = vrot.slane %v1646, %v1650
    %v1669 = vunpack.c.l.b16 %v1630
    %v1670 = vunpack.c.l.b16 %v1631
    %v1671 = vunpack.c.l.b16 %v1632
    %v1672 = vunpack.c.l.b16 %v1633
    %v1673 = vunpack.c.l.b16 %v1634
    %v1674 = vunpack.c.l.b16 %v1635
    %v1675 = vunpack.c.l.b16 %v1636
    %v1676 = vunpack.c.l.b16 %v1637
    %v1677 = vunpack.c.l.b16 %v1638
    %v1678 = vunpack.c.l.b16 %v1639
    %v1679 = vunpack.c.l.b16 %v1640
    %v1680 = vunpack.c.l.b16 %v1641
    %v1681 = vunpack.c.l.b16 %v1642
    %v1682 = vunpack.c.l.b16 %v1643
    %v1683 = vunpack.c.l.b16 %v1644
    %v1684 = vunpack.c.l.b16 %v1645
    %v1685 = vpack.c.b16 %v1670, %v1669
    %v1686 = vpack.c.b16 %v1672, %v1671
    %v1687 = vpack.c.b16 %v1674, %v1673
    %v1688 = vpack.c.b16 %v1676, %v1675
    %v1689 = vpack.c.b16 %v1678, %v1677
    %v1690 = vpack.c.b16 %v1680, %v1679
    %v1691 = vpack.c.b16 %v1682, %v1681
    %v1692 = vpack.c.b16 %v1684, %v1683
    %1701 = vmatprep.subr.bf16.mxu0 0
    %1702 = vmatpush1.bf16.msra.mxu0 %v1692
    %1703 = vmatprep.subr.bf16.mxu0 0
    %1704 = vmatpush1.bf16.msra.mxu0 %v1691
    %1705 = vmatprep.subr.bf16.mxu0 0
    %1706 = vmatpush1.bf16.msra.mxu0 %v1690
    %1707 = vmatprep.subr.bf16.mxu0 0
    %1708 = vmatpush1.bf16.msra.mxu0 %v1689
    %1709 = vmatprep.subr.bf16.mxu0 0
    %1710 = vmatpush1.bf16.msra.mxu0 %v1688
    %1711 = vmatprep.subr.bf16.mxu0 0
    %1712 = vmatpush1.bf16.msra.mxu0 %v1687
    %1713 = vmatprep.subr.bf16.mxu0 0
    %1714 = vmatpush1.bf16.msra.mxu0 %v1686
    %1715 = vmatprep.subr.bf16.mxu0 0
    %1716 = vmatpush1.bf16.msra.mxu0 %v1685
    %1717 = vmatprep.subr.bf16.mxu0 0
    %1718 = vmatpush2.bf16.msra.mxu0 0
    %1719 = vmatprep.subr.bf16.mxu0 0
    %1720 = vmatpush2.bf16.msra.mxu0 0
    %1721 = vmatprep.subr.bf16.mxu0 0
    %1722 = vmatpush2.bf16.msra.mxu0 0
    %1723 = vmatprep.subr.bf16.mxu0 0
    %1724 = vmatpush2.bf16.msra.mxu0 0
    %1725 = vmatprep.subr.bf16.mxu0 0
    %1726 = vmatpush2.bf16.msra.mxu0 0
    %1727 = vmatprep.subr.bf16.mxu0 0
    %1728 = vmatpush2.bf16.msra.mxu0 0
    %1729 = vmatprep.subr.bf16.mxu0 0
    %1730 = vmatpush2.bf16.msra.mxu0 0
    %1731 = vmatprep.subr.bf16.mxu0 0
    %1732 = vmatpush2.bf16.msra.mxu0 0
    %1733 = vmatprep.mubr.bf16.mxu0 0
    %1734 = vmatmul.mubr.bf16.gmra.mxu0 %v1629
    %v1735 = vpop.f32.mrf.mxu0
    %v1736 = vadd.f32 %v1651, %v1735
    %v1737 = vpop.f32.mrf.mxu0
    %v1738 = vpop.f32.mrf.mxu0
    %v1739 = vpop.f32.mrf.mxu0
    %1740 = vdwg.mxu0
    %1741 = vst [vmem:[#allocation12] sm:$0xff] %v1736
    // Predicated region
    $region54: #{forward.1} parent=1 // pred_check
      _
    $region55: #{forward.1} parent=1 // pred_check_branch
      %1743 = sbr.rel (0) target = $region57
    $region56: #{forward.1} parent=1 // pred_region
      %s1745 = ssub.s32 128, 128
      %1746 = vsyncadd [#allocation6], %s1745
      %s1748 = sshll.u32 [#allocation12], 4
      %s1749 = int_to_ptr.vmem [resolvable:$true] %s1748
      %1751 = dma.vmem_to_hbm [thread:$0]  %s1749, 128, %s9, [#allocation6]
    $region57: #{forward.1} parent=1 // pred_fallthru
      _
    // Predicated region
    $region58: #{forward.1} parent=1 // pred_check
      _
    $region59: #{forward.1} parent=1 // pred_check_branch
      %1753 = sbr.rel (0) target = $region61
    $region60: #{forward.1} parent=1 // pred_region
      %1754 = dma.done [#allocation6], 128
    $region61: #{forward.1} parent=1 // pred_fallthru
      _
    %1755 = vsyncpa [#allocation5], 1
    %1756 = vsyncpa [#allocation8], 1
    %1757 = vsyncpa [#allocation11], 1
    %1758 = vsyncpa [#allocation6], 1

</llo_original>
